<compile_context>
chip_gen: v6e
topology: v6e:2x2x1
jax: 0.10.0
libtpu: 0.0.40
codegen_flags: <defaults>
</compile_context>

<pallas_src>
import jax
import jax.numpy as jnp
from jax.experimental import pallas as pl
from jax.experimental.pallas import tpu as pltpu

PARAMS = {"num_classes": 10, "nz": 100, "input_size": (1, 28, 28)}


def _leaky_relu(x, slope=0.2):
    return jnp.where(x >= 0, x, slope * x)


def _discriminator_kernel(
    x_ref,            # (TB, F_pad)   bf16
    w1_ref, b1_ref,   # (F_pad, H) bf16, (1, H) f32
    w2_ref, b2_ref,   # (H, H)     bf16, (1, H) f32
    w3_ref, b3_ref,   # (H, H)     bf16, (1, H) f32
    w4_ref,           # (1, H)     bf16  (transposed last-layer weight, lane-major)
    b4_ref,           # (1, 1)     f32   (SMEM scalar)
    o_ref,            # (TB, 1)    f32
):
    x = x_ref[...]

    # Layer 1: Linear(F_pad -> H) + LeakyReLU(0.2)
    h = jnp.dot(x, w1_ref[...], preferred_element_type=jnp.float32) + b1_ref[...]
    h = _leaky_relu(h)

    # Layer 2: Linear(H -> H) + Dropout(0.4)[identity, eval] + LeakyReLU(0.2)
    h = jnp.dot(h.astype(jnp.bfloat16), w2_ref[...],
                preferred_element_type=jnp.float32) + b2_ref[...]
    h = _leaky_relu(h)

    # Layer 3: Linear(H -> H) + Dropout(0.4)[identity, eval] + LeakyReLU(0.2)
    h = jnp.dot(h.astype(jnp.bfloat16), w3_ref[...],
                preferred_element_type=jnp.float32) + b3_ref[...]
    h = _leaky_relu(h)

    # Layer 4: Linear(H -> 1) + Sigmoid — VPU multiply + lane reduction
    # (avoids an N=1 MXU matmul and a (H, 1) lane-padded weight in VMEM).
    w4_row = w4_ref[...].astype(jnp.float32)                 # (1, H)
    logit = jnp.sum(h * w4_row, axis=-1, keepdims=True) + b4_ref[0, 0]
    o_ref[...] = jax.nn.sigmoid(logit)


@jax.jit
def discriminator_forward(img, params):
    """img: (B, C, H, W) float32 (NCHW, as in PyTorch). Returns (B, 1)."""
    B = img.shape[0]
    x = img.reshape(B, -1).astype(jnp.float32)      # flatten, like img.view(B, -1)
    F = x.shape[1]                                  # 784
    H = params["w1"].shape[1]                       # 512

    # --- Lane-align the feature dim: 784 -> 896 (zero padding, exact math) ---
    F_pad = pl.cdiv(F, 128) * 128
    x = jnp.pad(x, ((0, 0), (0, F_pad - F)))

    # --- Batch tiling: pick TB, pad B to a multiple of it ---
    if B >= 256:
        TB = 256                                    # multiple of 256 => full MXU M tiles
    else:
        TB = max(8, pl.cdiv(B, 8) * 8)              # small-batch case: one sublane-aligned tile
    B_pad = pl.cdiv(B, TB) * TB
    x = jnp.pad(x, ((0, B_pad - B), (0, 0))).astype(jnp.bfloat16)

    # --- Weight prep: bf16, pad w1's K dim, transpose w4 to a lane-major row ---
    w1 = jnp.pad(params["w1"], ((0, F_pad - F), (0, 0))).astype(jnp.bfloat16)
    w2 = params["w2"].astype(jnp.bfloat16)
    w3 = params["w3"].astype(jnp.bfloat16)
    w4_row = params["w4"].T.astype(jnp.bfloat16)    # (1, H)
    b1 = params["b1"].astype(jnp.float32)
    b2 = params["b2"].astype(jnp.float32)
    b3 = params["b3"].astype(jnp.float32)
    b4 = params["b4"].astype(jnp.float32)           # (1, 1) scalar -> SMEM

    grid = (B_pad // TB,)
    const = lambda i: (0, 0)

    cost = pl.CostEstimate(
        flops=2 * B_pad * (F_pad * H + 2 * H * H + H),
        transcendentals=B_pad,
        bytes_accessed=(B_pad * F_pad * 2                       # x (bf16)
                        + (F_pad * H + 2 * H * H + H) * 2       # weights (bf16)
                        + 3 * H * 4 + 4                         # biases (f32)
                        + B_pad * 4),                           # output
    )

    out = pl.pallas_call(
        _discriminator_kernel,
        out_shape=jax.ShapeDtypeStruct((B_pad, 1), jnp.float32),
        grid=grid,
        in_specs=[
            pl.BlockSpec((TB, F_pad), lambda i: (i, 0)),        # x (batch-tiled)
            pl.BlockSpec((F_pad, H), const),                    # w1 (resident)
            pl.BlockSpec((1, H), const),                        # b1
            pl.BlockSpec((H, H), const),                        # w2
            pl.BlockSpec((1, H), const),                        # b2
            pl.BlockSpec((H, H), const),                        # w3
            pl.BlockSpec((1, H), const),                        # b3
            pl.BlockSpec((1, H), const),                        # w4 (row)
            pl.BlockSpec(memory_space=pltpu.MemorySpace.SMEM),  # b4 scalar
        ],
        out_specs=pl.BlockSpec((TB, 1), lambda i: (i, 0)),
        compiler_params=pltpu.CompilerParams(
            dimension_semantics=("parallel",),
        ),
        cost_estimate=cost,
    )(x, w1, b1, w2, b2, w3, b3, w4_row, b4)

    return out[:B]


def init_params(key, in_features=784, hidden=512):
    """Deterministic init mimicking PyTorch nn.Linear default (U[-1/sqrt(fan_in), 1/sqrt(fan_in)])."""
    dims = [(in_features, hidden), (hidden, hidden), (hidden, hidden), (hidden, 1)]
    params = {}
    keys = jax.random.split(key, 2 * len(dims))
    for i, (fan_in, fan_out) in enumerate(dims):
        bound = 1.0 / (fan_in ** 0.5)
        w = jax.random.uniform(keys[2 * i], (fan_in, fan_out), jnp.float32,
                               minval=-bound, maxval=bound)
        b = jax.random.uniform(keys[2 * i + 1], (1, fan_out), jnp.float32,
                               minval=-bound, maxval=bound)
        params[f"w{i + 1}"] = w
        params[f"b{i + 1}"] = b
    return params


def _reference_forward(img, params):
    """Pure-JAX f32 reference for sanity checking."""
    x = img.reshape(img.shape[0], -1).astype(jnp.float32)
    h = _leaky_relu(x @ params["w1"] + params["b1"])
    h = _leaky_relu(h @ params["w2"] + params["b2"])
    h = _leaky_relu(h @ params["w3"] + params["b3"])
    return jax.nn.sigmoid(h @ params["w4"] + params["b4"])


if __name__ == "__main__":
    key = jax.random.PRNGKey(0)
    k_param, k_img = jax.random.split(key)

    C, Hh, W = PARAMS["input_size"]     # (1, 28, 28)
    B = 8
    img = jax.random.normal(k_img, (B, C, Hh, W), dtype=jnp.float32)

    mlp_params = init_params(k_param, in_features=C * Hh * W, hidden=512)

    out = discriminator_forward(img, mlp_params)
    out = jax.block_until_ready(out)

    ref = _reference_forward(img, mlp_params)
    assert out.shape == (B, 1), out.shape
    # bf16 weights with f32 accumulation: loosen tolerance on the sigmoid output.
    assert jnp.allclose(out, ref, atol=2e-2, rtol=0.0), (
        "mismatch vs reference", float(jnp.max(jnp.abs(out - ref))))

    print("KERNEL_OK")
</pallas_src>

<mosaic_0001>
module attributes {stable_mosaic.version = 11 : i64} {
  func.func @_discriminator_kernel(%arg0: i32, %arg1: memref<8x896xbf16, #tpu.memory_space<vmem>>, %arg2: memref<896x512xbf16, #tpu.memory_space<vmem>>, %arg3: memref<1x512xf32, #tpu.memory_space<vmem>>, %arg4: memref<512x512xbf16, #tpu.memory_space<vmem>>, %arg5: memref<1x512xf32, #tpu.memory_space<vmem>>, %arg6: memref<512x512xbf16, #tpu.memory_space<vmem>>, %arg7: memref<1x512xf32, #tpu.memory_space<vmem>>, %arg8: memref<1x512xbf16, #tpu.memory_space<vmem>>, %arg9: memref<1x1xf32, #tpu.memory_space<smem>>, %arg10: memref<8x1xf32, #tpu.memory_space<vmem>>) attributes {dimension_semantics = [#tpu.dimension_semantics<parallel>], iteration_bounds = array<i64: 1>, scalar_prefetch = 0 : i64, scratch_operands = 0 : i64, tpu.core_type = #tpu.core_type<tc>, window_params = [{transform_indices = @transform_0, window_bounds = array<i64: 8, 896>}, {pipeline_mode = #tpu.pipeline_mode<synchronous>, transform_indices = @transform_1, window_bounds = array<i64: 896, 512>}, {pipeline_mode = #tpu.pipeline_mode<synchronous>, transform_indices = @transform_2, window_bounds = array<i64: 1, 512>}, {pipeline_mode = #tpu.pipeline_mode<synchronous>, transform_indices = @transform_3, window_bounds = array<i64: 512, 512>}, {pipeline_mode = #tpu.pipeline_mode<synchronous>, transform_indices = @transform_4, window_bounds = array<i64: 1, 512>}, {pipeline_mode = #tpu.pipeline_mode<synchronous>, transform_indices = @transform_5, window_bounds = array<i64: 512, 512>}, {pipeline_mode = #tpu.pipeline_mode<synchronous>, transform_indices = @transform_6, window_bounds = array<i64: 1, 512>}, {pipeline_mode = #tpu.pipeline_mode<synchronous>, transform_indices = @transform_7, window_bounds = array<i64: 1, 512>}, {transform_indices = @transform_8, window_bounds = array<i64: 1, 1>}, {transform_indices = @transform_9, window_bounds = array<i64: 8, 1>}]} {
    %c0 = arith.constant 0 : index
    %c0_0 = arith.constant 0 : index
    %0 = vector.load %arg1[%c0, %c0_0] : memref<8x896xbf16, #tpu.memory_space<vmem>>, vector<8x896xbf16>
    %c0_1 = arith.constant 0 : index
    %c0_2 = arith.constant 0 : index
    %1 = vector.load %arg2[%c0_1, %c0_2] : memref<896x512xbf16, #tpu.memory_space<vmem>>, vector<896x512xbf16>
    %cst = arith.constant dense<0.000000e+00> : vector<8x512xf32>
    %2 = tpu.matmul %0, %1, %cst {dimension_numbers = #tpu.dot_dimension_numbers<[1], [0], [0], [1], [0, 0, 1, 1], [], []>} : vector<8x896xbf16>, vector<896x512xbf16>, vector<8x512xf32> -> vector<8x512xf32>
    %c0_3 = arith.constant 0 : index
    %c0_4 = arith.constant 0 : index
    %3 = vector.load %arg3[%c0_3, %c0_4] : memref<1x512xf32, #tpu.memory_space<vmem>>, vector<1x512xf32>
    %4 = vector.broadcast %3 : vector<1x512xf32> to vector<8x512xf32>
    %5 = arith.addf %2, %4 : vector<8x512xf32>
    %cst_5 = arith.constant 0.000000e+00 : f32
    %6 = vector.broadcast %cst_5 : f32 to vector<8x512xf32>
    %7 = arith.cmpf oge, %5, %6 : vector<8x512xf32>
    %cst_6 = arith.constant 2.000000e-01 : f32
    %8 = vector.broadcast %cst_6 : f32 to vector<8x512xf32>
    %9 = arith.mulf %8, %5 : vector<8x512xf32>
    %10 = arith.select %7, %5, %9 : vector<8x512xi1>, vector<8x512xf32>
    %11 = arith.truncf %10 : vector<8x512xf32> to vector<8x512xbf16>
    %c0_7 = arith.constant 0 : index
    %c0_8 = arith.constant 0 : index
    %12 = vector.load %arg4[%c0_7, %c0_8] : memref<512x512xbf16, #tpu.memory_space<vmem>>, vector<512x512xbf16>
    %cst_9 = arith.constant dense<0.000000e+00> : vector<8x512xf32>
    %13 = tpu.matmul %11, %12, %cst_9 {dimension_numbers = #tpu.dot_dimension_numbers<[1], [0], [0], [1], [0, 0, 1, 1], [], []>} : vector<8x512xbf16>, vector<512x512xbf16>, vector<8x512xf32> -> vector<8x512xf32>
    %c0_10 = arith.constant 0 : index
    %c0_11 = arith.constant 0 : index
    %14 = vector.load %arg5[%c0_10, %c0_11] : memref<1x512xf32, #tpu.memory_space<vmem>>, vector<1x512xf32>
    %15 = vector.broadcast %14 : vector<1x512xf32> to vector<8x512xf32>
    %16 = arith.addf %13, %15 : vector<8x512xf32>
    %cst_12 = arith.constant 0.000000e+00 : f32
    %17 = vector.broadcast %cst_12 : f32 to vector<8x512xf32>
    %18 = arith.cmpf oge, %16, %17 : vector<8x512xf32>
    %cst_13 = arith.constant 2.000000e-01 : f32
    %19 = vector.broadcast %cst_13 : f32 to vector<8x512xf32>
    %20 = arith.mulf %19, %16 : vector<8x512xf32>
    %21 = arith.select %18, %16, %20 : vector<8x512xi1>, vector<8x512xf32>
    %22 = arith.truncf %21 : vector<8x512xf32> to vector<8x512xbf16>
    %c0_14 = arith.constant 0 : index
    %c0_15 = arith.constant 0 : index
    %23 = vector.load %arg6[%c0_14, %c0_15] : memref<512x512xbf16, #tpu.memory_space<vmem>>, vector<512x512xbf16>
    %cst_16 = arith.constant dense<0.000000e+00> : vector<8x512xf32>
    %24 = tpu.matmul %22, %23, %cst_16 {dimension_numbers = #tpu.dot_dimension_numbers<[1], [0], [0], [1], [0, 0, 1, 1], [], []>} : vector<8x512xbf16>, vector<512x512xbf16>, vector<8x512xf32> -> vector<8x512xf32>
    %c0_17 = arith.constant 0 : index
    %c0_18 = arith.constant 0 : index
    %25 = vector.load %arg7[%c0_17, %c0_18] : memref<1x512xf32, #tpu.memory_space<vmem>>, vector<1x512xf32>
    %26 = vector.broadcast %25 : vector<1x512xf32> to vector<8x512xf32>
    %27 = arith.addf %24, %26 : vector<8x512xf32>
    %cst_19 = arith.constant 0.000000e+00 : f32
    %28 = vector.broadcast %cst_19 : f32 to vector<8x512xf32>
    %29 = arith.cmpf oge, %27, %28 : vector<8x512xf32>
    %cst_20 = arith.constant 2.000000e-01 : f32
    %30 = vector.broadcast %cst_20 : f32 to vector<8x512xf32>
    %31 = arith.mulf %30, %27 : vector<8x512xf32>
    %32 = arith.select %29, %27, %31 : vector<8x512xi1>, vector<8x512xf32>
    %c0_21 = arith.constant 0 : index
    %c0_22 = arith.constant 0 : index
    %33 = vector.load %arg8[%c0_21, %c0_22] : memref<1x512xbf16, #tpu.memory_space<vmem>>, vector<1x512xbf16>
    %34 = arith.extf %33 : vector<1x512xbf16> to vector<1x512xf32>
    %35 = vector.broadcast %34 : vector<1x512xf32> to vector<8x512xf32>
    %36 = arith.mulf %32, %35 : vector<8x512xf32>
    %cst_23 = arith.constant dense<0.000000e+00> : vector<8xf32>
    %37 = vector.multi_reduction <add>, %36, %cst_23 [1] : vector<8x512xf32> to vector<8xf32>
    %38 = vector.shape_cast %37 : vector<8xf32> to vector<8x1xf32>
    %c0_24 = arith.constant 0 : index
    %c0_25 = arith.constant 0 : index
    %39 = memref.load %arg9[%c0_24, %c0_25] : memref<1x1xf32, #tpu.memory_space<smem>>
    %40 = vector.broadcast %39 : f32 to vector<8x1xf32>
    %41 = arith.addf %38, %40 : vector<8x1xf32>
    %42 = arith.negf %41 : vector<8x1xf32>
    %43 = math.exp %42 : vector<8x1xf32>
    %cst_26 = arith.constant 1.000000e+00 : f32
    %44 = vector.broadcast %cst_26 : f32 to vector<8x1xf32>
    %45 = arith.addf %44, %43 : vector<8x1xf32>
    %46 = arith.divf %44, %45 : vector<8x1xf32>
    %c0_27 = arith.constant 0 : index
    %c0_28 = arith.constant 0 : index
    %47 = vector.load %arg10[%c0_27, %c0_28] : memref<8x1xf32, #tpu.memory_space<vmem>>, vector<8x1xf32>
    tpu.vector_store %arg10[%c0_27, %c0_28], %46 {strides = array<i32>} : memref<8x1xf32, #tpu.memory_space<vmem>>, vector<8x1xf32>,
    return
  }
  func.func @transform_0(%arg0: i32) -> (i32, i32) {
    %c0_i32 = arith.constant 0 : i32
    %c0_i32_0 = arith.constant 0 : i32
    return %arg0, %c0_i32 : i32, i32
  }
  func.func @transform_1(%arg0: i32) -> (i32, i32) {
    %c0_i32 = arith.constant 0 : i32
    %c0_i32_0 = arith.constant 0 : i32
    %c0_i32_1 = arith.constant 0 : i32
    return %c0_i32, %c0_i32_0 : i32, i32
  }
  func.func @transform_2(%arg0: i32) -> (i32, i32) {
    %c0_i32 = arith.constant 0 : i32
    %c0_i32_0 = arith.constant 0 : i32
    %c0_i32_1 = arith.constant 0 : i32
    return %c0_i32, %c0_i32_0 : i32, i32
  }
  func.func @transform_3(%arg0: i32) -> (i32, i32) {
    %c0_i32 = arith.constant 0 : i32
    %c0_i32_0 = arith.constant 0 : i32
    %c0_i32_1 = arith.constant 0 : i32
    return %c0_i32, %c0_i32_0 : i32, i32
  }
  func.func @transform_4(%arg0: i32) -> (i32, i32) {
    %c0_i32 = arith.constant 0 : i32
    %c0_i32_0 = arith.constant 0 : i32
    %c0_i32_1 = arith.constant 0 : i32
    return %c0_i32, %c0_i32_0 : i32, i32
  }
  func.func @transform_5(%arg0: i32) -> (i32, i32) {
    %c0_i32 = arith.constant 0 : i32
    %c0_i32_0 = arith.constant 0 : i32
    %c0_i32_1 = arith.constant 0 : i32
    return %c0_i32, %c0_i32_0 : i32, i32
  }
  func.func @transform_6(%arg0: i32) -> (i32, i32) {
    %c0_i32 = arith.constant 0 : i32
    %c0_i32_0 = arith.constant 0 : i32
    %c0_i32_1 = arith.constant 0 : i32
    return %c0_i32, %c0_i32_0 : i32, i32
  }
  func.func @transform_7(%arg0: i32) -> (i32, i32) {
    %c0_i32 = arith.constant 0 : i32
    %c0_i32_0 = arith.constant 0 : i32
    %c0_i32_1 = arith.constant 0 : i32
    return %c0_i32, %c0_i32_0 : i32, i32
  }
  func.func @transform_8(%arg0: i32) -> (i32, i32) {
    %c0_i32 = arith.constant 0 : i32
    %c0_i32_0 = arith.constant 0 : i32
    %c0_i32_1 = arith.constant 0 : i32
    return %c0_i32, %c0_i32_0 : i32, i32
  }
  func.func @transform_9(%arg0: i32) -> (i32, i32) {
    %c0_i32 = arith.constant 0 : i32
    %c0_i32_0 = arith.constant 0 : i32
    return %arg0, %c0_i32 : i32, i32
  }
}

</mosaic_0001>

<llo_original>
// kernel: discriminator_forward.1
$region0: #{discriminator_forward.1}
  #allocation0 [shape = 'u32[]', space=smem, size = 0x4, offset = 0x4, fixed_abs, tag = 'smem constant byte address 0x4 - core index']
  #allocation1 [shape = 'u32[144,128]{1,0:T(1,128)}', space=vmem, size = 0x12000, scoped, tag = 'internal scratch']
  #allocation2 [shape = 'f32[1,1]{1,0:T(1,128)S(6)}', space=smem, size = 0x200, scoped, tag = 'scoped memory for discriminator_forward.1']
  %s0 = inlined_call_operand.vmem [shape: bf16[8,896], index: 0, kind: input, shape index: {}]
  %s1 = inlined_call_operand.vmem [shape: bf16[896,512], index: 1, kind: input, shape index: {}]
  %s2 = inlined_call_operand.vmem [shape: f32[1,512], index: 2, kind: input, shape index: {}]
  %s3 = inlined_call_operand.vmem [shape: bf16[512,512], index: 3, kind: input, shape index: {}]
  %s4 = inlined_call_operand.vmem [shape: f32[1,512], index: 4, kind: input, shape index: {}]
  %s5 = inlined_call_operand.vmem [shape: bf16[512,512], index: 5, kind: input, shape index: {}]
  %s6 = inlined_call_operand.vmem [shape: f32[1,512], index: 6, kind: input, shape index: {}]
  %s7 = inlined_call_operand.vmem [shape: bf16[1,512], index: 7, kind: input, shape index: {}]
  %s8 = inlined_call_operand.<no memory space> [shape: f32[1,1], index: 8, kind: input, shape index: {}]
  %s9 = inlined_call_operand.vmem [shape: f32[8,1], index: 9, kind: output, shape index: {}]
  %s10 = sld [smem:[#allocation0]]
  $region46: #{discriminator_forward.1} parent=0
    _
  %s12 = ssub.s32 1, %s10
  %s13 = scalar_select 0, %s12, %s10
  %14 = sst [smem:[#allocation2]] %s8
  // Predicated region
  $region2: #{discriminator_forward.1} parent=0 // pred_check
    _
  $region3: #{discriminator_forward.1} parent=0 // pred_check_branch
    %16 = sbr.rel (0) target = $region5
  $region4: #{discriminator_forward.1} parent=0 // pred_region
    _
  $region5: #{discriminator_forward.1} parent=0 // pred_fallthru
    _
  // Predicated region
  $region6: #{discriminator_forward.1} parent=0 // pred_check
    _
  $region7: #{discriminator_forward.1} parent=0 // pred_check_branch
    %18 = sbr.rel (0) target = $region9
  $region8: #{discriminator_forward.1} parent=0 // pred_region
    _
  $region9: #{discriminator_forward.1} parent=0 // pred_fallthru
    _
  // Predicated region
  $region10: #{discriminator_forward.1} parent=0 // pred_check
    _
  $region11: #{discriminator_forward.1} parent=0 // pred_check_branch
    %20 = sbr.rel (0) target = $region13
  $region12: #{discriminator_forward.1} parent=0 // pred_region
    _
  $region13: #{discriminator_forward.1} parent=0 // pred_fallthru
    _
  // Predicated region
  $region14: #{discriminator_forward.1} parent=0 // pred_check
    _
  $region15: #{discriminator_forward.1} parent=0 // pred_check_branch
    %22 = sbr.rel (0) target = $region17
  $region16: #{discriminator_forward.1} parent=0 // pred_region
    _
  $region17: #{discriminator_forward.1} parent=0 // pred_fallthru
    _
  // Predicated region
  $region18: #{discriminator_forward.1} parent=0 // pred_check
    _
  $region19: #{discriminator_forward.1} parent=0 // pred_check_branch
    %24 = sbr.rel (0) target = $region21
  $region20: #{discriminator_forward.1} parent=0 // pred_region
    _
  $region21: #{discriminator_forward.1} parent=0 // pred_fallthru
    _
  // Predicated region
  $region22: #{discriminator_forward.1} parent=0 // pred_check
    _
  $region23: #{discriminator_forward.1} parent=0 // pred_check_branch
    %26 = sbr.rel (0) target = $region25
  $region24: #{discriminator_forward.1} parent=0 // pred_region
    _
  $region25: #{discriminator_forward.1} parent=0 // pred_fallthru
    _
  // Predicated region
  $region26: #{discriminator_forward.1} parent=0 // pred_check
    _
  $region27: #{discriminator_forward.1} parent=0 // pred_check_branch
    %28 = sbr.rel (0) target = $region29
  $region28: #{discriminator_forward.1} parent=0 // pred_region
    _
  $region29: #{discriminator_forward.1} parent=0 // pred_fallthru
    _
  // Predicated region
  $region30: #{discriminator_forward.1} parent=0 // pred_check
    _
  $region31: #{discriminator_forward.1} parent=0 // pred_check_branch
    %30 = sbr.rel (0) target = $region33
  $region32: #{discriminator_forward.1} parent=0 // pred_region
    _
  $region33: #{discriminator_forward.1} parent=0 // pred_fallthru
    _
  // Predicated region
  $region34: #{discriminator_forward.1} parent=0 // pred_check
    _
  $region35: #{discriminator_forward.1} parent=0 // pred_check_branch
    %32 = sbr.rel (0) target = $region37
  $region36: #{discriminator_forward.1} parent=0 // pred_region
    _
  $region37: #{discriminator_forward.1} parent=0 // pred_fallthru
    _
  %v34 = vld [vmem:[%s0] sm:$0xff]
  %v35 = vld [vmem:[%s0 + $0x8] sm:$0xff]
  %v36 = vld [vmem:[%s0 + $0x10] sm:$0xff]
  %v37 = vld [vmem:[%s0 + $0x18] sm:$0xf]
  %v38 = vld [vmem:[%s1] sm:$0xff]
  %v39 = vld [vmem:[%s1 + $0x8] sm:$0xff]
  %v40 = vld [vmem:[%s1 + $0x10] sm:$0xff]
  %v41 = vld [vmem:[%s1 + $0x18] sm:$0xff]
  %v42 = vld [vmem:[%s1 + $0x20] sm:$0xff]
  %v43 = vld [vmem:[%s1 + $0x28] sm:$0xff]
  %v44 = vld [vmem:[%s1 + $0x30] sm:$0xff]
  %v45 = vld [vmem:[%s1 + $0x38] sm:$0xff]
  %v46 = vld [vmem:[%s1 + $0x40] sm:$0xff]
  %v47 = vld [vmem:[%s1 + $0x48] sm:$0xff]
  %v48 = vld [vmem:[%s1 + $0x50] sm:$0xff]
  %v49 = vld [vmem:[%s1 + $0x58] sm:$0xff]
  %v50 = vld [vmem:[%s1 + $0x60] sm:$0xff]
  %v51 = vld [vmem:[%s1 + $0x68] sm:$0xff]
  %v52 = vld [vmem:[%s1 + $0x70] sm:$0xff]
  %v53 = vld [vmem:[%s1 + $0x78] sm:$0xff]
  %v54 = vld [vmem:[%s1 + $0x80] sm:$0xff]
  %v55 = vld [vmem:[%s1 + $0x88] sm:$0xff]
  %v56 = vld [vmem:[%s1 + $0x90] sm:$0xff]
  %v57 = vld [vmem:[%s1 + $0x98] sm:$0xff]
  %v58 = vld [vmem:[%s1 + $0xa0] sm:$0xff]
  %v59 = vld [vmem:[%s1 + $0xa8] sm:$0xff]
  %v60 = vld [vmem:[%s1 + $0xb0] sm:$0xff]
  %v61 = vld [vmem:[%s1 + $0xb8] sm:$0xff]
  %v62 = vld [vmem:[%s1 + $0xc0] sm:$0xff]
  %v63 = vld [vmem:[%s1 + $0xc8] sm:$0xff]
  %v64 = vld [vmem:[%s1 + $0xd0] sm:$0xff]
  %v65 = vld [vmem:[%s1 + $0xd8] sm:$0xff]
  %v66 = vld [vmem:[%s1 + $0xe0] sm:$0xff]
  %v67 = vld [vmem:[%s1 + $0xe8] sm:$0xff]
  %v68 = vld [vmem:[%s1 + $0xf0] sm:$0xff]
  %v69 = vld [vmem:[%s1 + $0xf8] sm:$0xff]
  %v70 = vld [vmem:[%s1 + $0x100] sm:$0xff]
  %v71 = vld [vmem:[%s1 + $0x108] sm:$0xff]
  %v72 = vld [vmem:[%s1 + $0x110] sm:$0xff]
  %v73 = vld [vmem:[%s1 + $0x118] sm:$0xff]
  %v74 = vld [vmem:[%s1 + $0x120] sm:$0xff]
  %v75 = vld [vmem:[%s1 + $0x128] sm:$0xff]
  %v76 = vld [vmem:[%s1 + $0x130] sm:$0xff]
  %v77 = vld [vmem:[%s1 + $0x138] sm:$0xff]
  %v78 = vld [vmem:[%s1 + $0x140] sm:$0xff]
  %v79 = vld [vmem:[%s1 + $0x148] sm:$0xff]
  %v80 = vld [vmem:[%s1 + $0x150] sm:$0xff]
  %v81 = vld [vmem:[%s1 + $0x158] sm:$0xff]
  %v82 = vld [vmem:[%s1 + $0x160] sm:$0xff]
  %v83 = vld [vmem:[%s1 + $0x168] sm:$0xff]
  %v84 = vld [vmem:[%s1 + $0x170] sm:$0xff]
  %v85 = vld [vmem:[%s1 + $0x178] sm:$0xff]
  %v86 = vld [vmem:[%s1 + $0x180] sm:$0xff]
  %v87 = vld [vmem:[%s1 + $0x188] sm:$0xff]
  %v88 = vld [vmem:[%s1 + $0x190] sm:$0xff]
  %v89 = vld [vmem:[%s1 + $0x198] sm:$0xff]
  %v90 = vld [vmem:[%s1 + $0x1a0] sm:$0xff]
  %v91 = vld [vmem:[%s1 + $0x1a8] sm:$0xff]
  %v92 = vld [vmem:[%s1 + $0x1b0] sm:$0xff]
  %v93 = vld [vmem:[%s1 + $0x1b8] sm:$0xff]
  %v94 = vld [vmem:[%s1 + $0x1c0] sm:$0xff]
  %v95 = vld [vmem:[%s1 + $0x1c8] sm:$0xff]
  %v96 = vld [vmem:[%s1 + $0x1d0] sm:$0xff]
  %v97 = vld [vmem:[%s1 + $0x1d8] sm:$0xff]
  %v98 = vld [vmem:[%s1 + $0x1e0] sm:$0xff]
  %v99 = vld [vmem:[%s1 + $0x1e8] sm:$0xff]
  %v100 = vld [vmem:[%s1 + $0x1f0] sm:$0xff]
  %v101 = vld [vmem:[%s1 + $0x1f8] sm:$0xff]
  %v102 = vld [vmem:[%s1 + $0x200] sm:$0xff]
  %v103 = vld [vmem:[%s1 + $0x208] sm:$0xff]
  %v104 = vld [vmem:[%s1 + $0x210] sm:$0xff]
  %v105 = vld [vmem:[%s1 + $0x218] sm:$0xff]
  %v106 = vld [vmem:[%s1 + $0x220] sm:$0xff]
  %v107 = vld [vmem:[%s1 + $0x228] sm:$0xff]
  %v108 = vld [vmem:[%s1 + $0x230] sm:$0xff]
  %v109 = vld [vmem:[%s1 + $0x238] sm:$0xff]
  %v110 = vld [vmem:[%s1 + $0x240] sm:$0xff]
  %v111 = vld [vmem:[%s1 + $0x248] sm:$0xff]
  %v112 = vld [vmem:[%s1 + $0x250] sm:$0xff]
  %v113 = vld [vmem:[%s1 + $0x258] sm:$0xff]
  %v114 = vld [vmem:[%s1 + $0x260] sm:$0xff]
  %v115 = vld [vmem:[%s1 + $0x268] sm:$0xff]
  %v116 = vld [vmem:[%s1 + $0x270] sm:$0xff]
  %v117 = vld [vmem:[%s1 + $0x278] sm:$0xff]
  %v118 = vld [vmem:[%s1 + $0x280] sm:$0xff]
  %v119 = vld [vmem:[%s1 + $0x288] sm:$0xff]
  %v120 = vld [vmem:[%s1 + $0x290] sm:$0xff]
  %v121 = vld [vmem:[%s1 + $0x298] sm:$0xff]
  %v122 = vld [vmem:[%s1 + $0x2a0] sm:$0xff]
  %v123 = vld [vmem:[%s1 + $0x2a8] sm:$0xff]
  %v124 = vld [vmem:[%s1 + $0x2b0] sm:$0xff]
  %v125 = vld [vmem:[%s1 + $0x2b8] sm:$0xff]
  %v126 = vld [vmem:[%s1 + $0x2c0] sm:$0xff]
  %v127 = vld [vmem:[%s1 + $0x2c8] sm:$0xff]
  %v128 = vld [vmem:[%s1 + $0x2d0] sm:$0xff]
  %v129 = vld [vmem:[%s1 + $0x2d8] sm:$0xff]
  %v130 = vld [vmem:[%s1 + $0x2e0] sm:$0xff]
  %v131 = vld [vmem:[%s1 + $0x2e8] sm:$0xff]
  %v132 = vld [vmem:[%s1 + $0x2f0] sm:$0xff]
  %v133 = vld [vmem:[%s1 + $0x2f8] sm:$0xff]
  %v134 = vld [vmem:[%s1 + $0x300] sm:$0xff]
  %v135 = vld [vmem:[%s1 + $0x308] sm:$0xff]
  %v136 = vld [vmem:[%s1 + $0x310] sm:$0xff]
  %v137 = vld [vmem:[%s1 + $0x318] sm:$0xff]
  %v138 = vld [vmem:[%s1 + $0x320] sm:$0xff]
  %v139 = vld [vmem:[%s1 + $0x328] sm:$0xff]
  %v140 = vld [vmem:[%s1 + $0x330] sm:$0xff]
  %v141 = vld [vmem:[%s1 + $0x338] sm:$0xff]
  %v142 = vld [vmem:[%s1 + $0x340] sm:$0xff]
  %v143 = vld [vmem:[%s1 + $0x348] sm:$0xff]
  %v144 = vld [vmem:[%s1 + $0x350] sm:$0xff]
  %v145 = vld [vmem:[%s1 + $0x358] sm:$0xff]
  %v146 = vld [vmem:[%s1 + $0x360] sm:$0xff]
  %v147 = vld [vmem:[%s1 + $0x368] sm:$0xff]
  %v148 = vld [vmem:[%s1 + $0x370] sm:$0xff]
  %v149 = vld [vmem:[%s1 + $0x378] sm:$0xff]
  %v150 = vld [vmem:[%s1 + $0x380] sm:$0xff]
  %v151 = vld [vmem:[%s1 + $0x388] sm:$0xff]
  %v152 = vld [vmem:[%s1 + $0x390] sm:$0xff]
  %v153 = vld [vmem:[%s1 + $0x398] sm:$0xff]
  %v154 = vld [vmem:[%s1 + $0x3a0] sm:$0xff]
  %v155 = vld [vmem:[%s1 + $0x3a8] sm:$0xff]
  %v156 = vld [vmem:[%s1 + $0x3b0] sm:$0xff]
  %v157 = vld [vmem:[%s1 + $0x3b8] sm:$0xff]
  %v158 = vld [vmem:[%s1 + $0x3c0] sm:$0xff]
  %v159 = vld [vmem:[%s1 + $0x3c8] sm:$0xff]
  %v160 = vld [vmem:[%s1 + $0x3d0] sm:$0xff]
  %v161 = vld [vmem:[%s1 + $0x3d8] sm:$0xff]
  %v162 = vld [vmem:[%s1 + $0x3e0] sm:$0xff]
  %v163 = vld [vmem:[%s1 + $0x3e8] sm:$0xff]
  %v164 = vld [vmem:[%s1 + $0x3f0] sm:$0xff]
  %v165 = vld [vmem:[%s1 + $0x3f8] sm:$0xff]
  %v166 = vld [vmem:[%s1 + $0x400] sm:$0xff]
  %v167 = vld [vmem:[%s1 + $0x408] sm:$0xff]
  %v168 = vld [vmem:[%s1 + $0x410] sm:$0xff]
  %v169 = vld [vmem:[%s1 + $0x418] sm:$0xff]
  %v170 = vld [vmem:[%s1 + $0x420] sm:$0xff]
  %v171 = vld [vmem:[%s1 + $0x428] sm:$0xff]
  %v172 = vld [vmem:[%s1 + $0x430] sm:$0xff]
  %v173 = vld [vmem:[%s1 + $0x438] sm:$0xff]
  %v174 = vld [vmem:[%s1 + $0x440] sm:$0xff]
  %v175 = vld [vmem:[%s1 + $0x448] sm:$0xff]
  %v176 = vld [vmem:[%s1 + $0x450] sm:$0xff]
  %v177 = vld [vmem:[%s1 + $0x458] sm:$0xff]
  %v178 = vld [vmem:[%s1 + $0x460] sm:$0xff]
  %v179 = vld [vmem:[%s1 + $0x468] sm:$0xff]
  %v180 = vld [vmem:[%s1 + $0x470] sm:$0xff]
  %v181 = vld [vmem:[%s1 + $0x478] sm:$0xff]
  %v182 = vld [vmem:[%s1 + $0x480] sm:$0xff]
  %v183 = vld [vmem:[%s1 + $0x488] sm:$0xff]
  %v184 = vld [vmem:[%s1 + $0x490] sm:$0xff]
  %v185 = vld [vmem:[%s1 + $0x498] sm:$0xff]
  %v186 = vld [vmem:[%s1 + $0x4a0] sm:$0xff]
  %v187 = vld [vmem:[%s1 + $0x4a8] sm:$0xff]
  %v188 = vld [vmem:[%s1 + $0x4b0] sm:$0xff]
  %v189 = vld [vmem:[%s1 + $0x4b8] sm:$0xff]
  %v190 = vld [vmem:[%s1 + $0x4c0] sm:$0xff]
  %v191 = vld [vmem:[%s1 + $0x4c8] sm:$0xff]
  %v192 = vld [vmem:[%s1 + $0x4d0] sm:$0xff]
  %v193 = vld [vmem:[%s1 + $0x4d8] sm:$0xff]
  %v194 = vld [vmem:[%s1 + $0x4e0] sm:$0xff]
  %v195 = vld [vmem:[%s1 + $0x4e8] sm:$0xff]
  %v196 = vld [vmem:[%s1 + $0x4f0] sm:$0xff]
  %v197 = vld [vmem:[%s1 + $0x4f8] sm:$0xff]
  %v198 = vld [vmem:[%s1 + $0x500] sm:$0xff]
  %v199 = vld [vmem:[%s1 + $0x508] sm:$0xff]
  %v200 = vld [vmem:[%s1 + $0x510] sm:$0xff]
  %v201 = vld [vmem:[%s1 + $0x518] sm:$0xff]
  %v202 = vld [vmem:[%s1 + $0x520] sm:$0xff]
  %v203 = vld [vmem:[%s1 + $0x528] sm:$0xff]
  %v204 = vld [vmem:[%s1 + $0x530] sm:$0xff]
  %v205 = vld [vmem:[%s1 + $0x538] sm:$0xff]
  %v206 = vld [vmem:[%s1 + $0x540] sm:$0xff]
  %v207 = vld [vmem:[%s1 + $0x548] sm:$0xff]
  %v208 = vld [vmem:[%s1 + $0x550] sm:$0xff]
  %v209 = vld [vmem:[%s1 + $0x558] sm:$0xff]
  %v210 = vld [vmem:[%s1 + $0x560] sm:$0xff]
  %v211 = vld [vmem:[%s1 + $0x568] sm:$0xff]
  %v212 = vld [vmem:[%s1 + $0x570] sm:$0xff]
  %v213 = vld [vmem:[%s1 + $0x578] sm:$0xff]
  %v214 = vld [vmem:[%s1 + $0x580] sm:$0xff]
  %v215 = vld [vmem:[%s1 + $0x588] sm:$0xff]
  %v216 = vld [vmem:[%s1 + $0x590] sm:$0xff]
  %v217 = vld [vmem:[%s1 + $0x598] sm:$0xff]
  %v218 = vld [vmem:[%s1 + $0x5a0] sm:$0xff]
  %v219 = vld [vmem:[%s1 + $0x5a8] sm:$0xff]
  %v220 = vld [vmem:[%s1 + $0x5b0] sm:$0xff]
  %v221 = vld [vmem:[%s1 + $0x5b8] sm:$0xff]
  %v222 = vld [vmem:[%s1 + $0x5c0] sm:$0xff]
  %v223 = vld [vmem:[%s1 + $0x5c8] sm:$0xff]
  %v224 = vld [vmem:[%s1 + $0x5d0] sm:$0xff]
  %v225 = vld [vmem:[%s1 + $0x5d8] sm:$0xff]
  %v226 = vld [vmem:[%s1 + $0x5e0] sm:$0xff]
  %v227 = vld [vmem:[%s1 + $0x5e8] sm:$0xff]
  %v228 = vld [vmem:[%s1 + $0x5f0] sm:$0xff]
  %v229 = vld [vmem:[%s1 + $0x5f8] sm:$0xff]
  %v230 = vld [vmem:[%s1 + $0x600] sm:$0xff]
  %v231 = vld [vmem:[%s1 + $0x608] sm:$0xff]
  %v232 = vld [vmem:[%s1 + $0x610] sm:$0xff]
  %v233 = vld [vmem:[%s1 + $0x618] sm:$0xff]
  %v234 = vld [vmem:[%s1 + $0x620] sm:$0xff]
  %v235 = vld [vmem:[%s1 + $0x628] sm:$0xff]
  %v236 = vld [vmem:[%s1 + $0x630] sm:$0xff]
  %v237 = vld [vmem:[%s1 + $0x638] sm:$0xff]
  %v238 = vld [vmem:[%s1 + $0x640] sm:$0xff]
  %v239 = vld [vmem:[%s1 + $0x648] sm:$0xff]
  %v240 = vld [vmem:[%s1 + $0x650] sm:$0xff]
  %v241 = vld [vmem:[%s1 + $0x658] sm:$0xff]
  %v242 = vld [vmem:[%s1 + $0x660] sm:$0xff]
  %v243 = vld [vmem:[%s1 + $0x668] sm:$0xff]
  %v244 = vld [vmem:[%s1 + $0x670] sm:$0xff]
  %v245 = vld [vmem:[%s1 + $0x678] sm:$0xff]
  %v246 = vld [vmem:[%s1 + $0x680] sm:$0xff]
  %v247 = vld [vmem:[%s1 + $0x688] sm:$0xff]
  %v248 = vld [vmem:[%s1 + $0x690] sm:$0xff]
  %v249 = vld [vmem:[%s1 + $0x698] sm:$0xff]
  %v250 = vld [vmem:[%s1 + $0x6a0] sm:$0xff]
  %v251 = vld [vmem:[%s1 + $0x6a8] sm:$0xff]
  %v252 = vld [vmem:[%s1 + $0x6b0] sm:$0xff]
  %v253 = vld [vmem:[%s1 + $0x6b8] sm:$0xff]
  %v254 = vld [vmem:[%s1 + $0x6c0] sm:$0xff]
  %v255 = vld [vmem:[%s1 + $0x6c8] sm:$0xff]
  %v256 = vld [vmem:[%s1 + $0x6d0] sm:$0xff]
  %v257 = vld [vmem:[%s1 + $0x6d8] sm:$0xff]
  %v258 = vld [vmem:[%s1 + $0x6e0] sm:$0xff]
  %v259 = vld [vmem:[%s1 + $0x6e8] sm:$0xff]
  %v260 = vld [vmem:[%s1 + $0x6f0] sm:$0xff]
  %v261 = vld [vmem:[%s1 + $0x6f8] sm:$0xff]
  %v262 = vld [vmem:[%s2] sm:$0xf]
  %v264 = vlaneseq
  %v265 = vshrl.u32 %v264, 7
  %v266 = vsub.s32 0, %v265
  %v267 = vrot.slane %v262, %v266
  %v268 = vlaneseq
  %v269 = vshrl.u32 %v268, 7
  %v270 = vsub.s32 1, %v269
  %v271 = vrot.slane %v262, %v270
  %v272 = vlaneseq
  %v273 = vshrl.u32 %v272, 7
  %v274 = vsub.s32 2, %v273
  %v275 = vrot.slane %v262, %v274
  %v276 = vlaneseq
  %v277 = vshrl.u32 %v276, 7
  %v278 = vsub.s32 3, %v277
  %v279 = vrot.slane %v262, %v278
  %v288 = vunpack.c.l.b16 %v34
  %v289 = vunpack.c.h.b16 %v34
  %v290 = vunpack.c.l.b16 %v35
  %v291 = vunpack.c.h.b16 %v35
  %v292 = vunpack.c.l.b16 %v36
  %v293 = vunpack.c.h.b16 %v36
  %v294 = vunpack.c.l.b16 %v37
  %v295 = vpack.c.b16 %v288, %v288
  %v296 = vpack.c.b16 %v289, %v289
  %v297 = vpack.c.b16 %v290, %v290
  %v298 = vpack.c.b16 %v291, %v291
  %v299 = vpack.c.b16 %v292, %v292
  %v300 = vpack.c.b16 %v293, %v293
  %v301 = vpack.c.b16 %v294, %v294
  %v533 = vunpack.c.l.b16 %v38
  %v534 = vunpack.c.h.b16 %v38
  %v535 = vunpack.c.l.b16 %v39
  %v536 = vunpack.c.h.b16 %v39
  %v537 = vunpack.c.l.b16 %v40
  %v538 = vunpack.c.h.b16 %v40
  %v539 = vunpack.c.l.b16 %v41
  %v540 = vunpack.c.h.b16 %v41
  %v541 = vunpack.c.l.b16 %v42
  %v542 = vunpack.c.h.b16 %v42
  %v543 = vunpack.c.l.b16 %v43
  %v544 = vunpack.c.h.b16 %v43
  %v545 = vunpack.c.l.b16 %v44
  %v546 = vunpack.c.h.b16 %v44
  %v547 = vunpack.c.l.b16 %v45
  %v548 = vunpack.c.h.b16 %v45
  %v549 = vunpack.c.l.b16 %v46
  %v550 = vunpack.c.h.b16 %v46
  %v551 = vunpack.c.l.b16 %v47
  %v552 = vunpack.c.h.b16 %v47
  %v553 = vunpack.c.l.b16 %v48
  %v554 = vunpack.c.h.b16 %v48
  %v555 = vunpack.c.l.b16 %v49
  %v556 = vunpack.c.h.b16 %v49
  %v557 = vunpack.c.l.b16 %v50
  %v558 = vunpack.c.h.b16 %v50
  %v559 = vunpack.c.l.b16 %v51
  %v560 = vunpack.c.h.b16 %v51
  %v561 = vunpack.c.l.b16 %v52
  %v562 = vunpack.c.h.b16 %v52
  %v563 = vunpack.c.l.b16 %v53
  %v564 = vunpack.c.h.b16 %v53
  %v565 = vunpack.c.l.b16 %v54
  %v566 = vunpack.c.h.b16 %v54
  %v567 = vunpack.c.l.b16 %v55
  %v568 = vunpack.c.h.b16 %v55
  %v569 = vunpack.c.l.b16 %v56
  %v570 = vunpack.c.h.b16 %v56
  %v571 = vunpack.c.l.b16 %v57
  %v572 = vunpack.c.h.b16 %v57
  %v573 = vunpack.c.l.b16 %v58
  %v574 = vunpack.c.h.b16 %v58
  %v575 = vunpack.c.l.b16 %v59
  %v576 = vunpack.c.h.b16 %v59
  %v577 = vunpack.c.l.b16 %v60
  %v578 = vunpack.c.h.b16 %v60
  %v579 = vunpack.c.l.b16 %v61
  %v580 = vunpack.c.h.b16 %v61
  %v581 = vunpack.c.l.b16 %v62
  %v582 = vunpack.c.h.b16 %v62
  %v583 = vunpack.c.l.b16 %v63
  %v584 = vunpack.c.h.b16 %v63
  %v585 = vunpack.c.l.b16 %v64
  %v586 = vunpack.c.h.b16 %v64
  %v587 = vunpack.c.l.b16 %v65
  %v588 = vunpack.c.h.b16 %v65
  %v589 = vunpack.c.l.b16 %v66
  %v590 = vunpack.c.h.b16 %v66
  %v591 = vunpack.c.l.b16 %v67
  %v592 = vunpack.c.h.b16 %v67
  %v593 = vunpack.c.l.b16 %v68
  %v594 = vunpack.c.h.b16 %v68
  %v595 = vunpack.c.l.b16 %v69
  %v596 = vunpack.c.h.b16 %v69
  %v597 = vunpack.c.l.b16 %v70
  %v598 = vunpack.c.h.b16 %v70
  %v599 = vunpack.c.l.b16 %v71
  %v600 = vunpack.c.h.b16 %v71
  %v601 = vunpack.c.l.b16 %v72
  %v602 = vunpack.c.h.b16 %v72
  %v603 = vunpack.c.l.b16 %v73
  %v604 = vunpack.c.h.b16 %v73
  %v605 = vunpack.c.l.b16 %v74
  %v606 = vunpack.c.h.b16 %v74
  %v607 = vunpack.c.l.b16 %v75
  %v608 = vunpack.c.h.b16 %v75
  %v609 = vunpack.c.l.b16 %v76
  %v610 = vunpack.c.h.b16 %v76
  %v611 = vunpack.c.l.b16 %v77
  %v612 = vunpack.c.h.b16 %v77
  %v613 = vunpack.c.l.b16 %v78
  %v614 = vunpack.c.h.b16 %v78
  %v615 = vunpack.c.l.b16 %v79
  %v616 = vunpack.c.h.b16 %v79
  %v617 = vunpack.c.l.b16 %v80
  %v618 = vunpack.c.h.b16 %v80
  %v619 = vunpack.c.l.b16 %v81
  %v620 = vunpack.c.h.b16 %v81
  %v621 = vunpack.c.l.b16 %v82
  %v622 = vunpack.c.h.b16 %v82
  %v623 = vunpack.c.l.b16 %v83
  %v624 = vunpack.c.h.b16 %v83
  %v625 = vunpack.c.l.b16 %v84
  %v626 = vunpack.c.h.b16 %v84
  %v627 = vunpack.c.l.b16 %v85
  %v628 = vunpack.c.h.b16 %v85
  %v629 = vunpack.c.l.b16 %v86
  %v630 = vunpack.c.h.b16 %v86
  %v631 = vunpack.c.l.b16 %v87
  %v632 = vunpack.c.h.b16 %v87
  %v633 = vunpack.c.l.b16 %v88
  %v634 = vunpack.c.h.b16 %v88
  %v635 = vunpack.c.l.b16 %v89
  %v636 = vunpack.c.h.b16 %v89
  %v637 = vunpack.c.l.b16 %v90
  %v638 = vunpack.c.h.b16 %v90
  %v639 = vunpack.c.l.b16 %v91
  %v640 = vunpack.c.h.b16 %v91
  %v641 = vunpack.c.l.b16 %v92
  %v642 = vunpack.c.h.b16 %v92
  %v643 = vunpack.c.l.b16 %v93
  %v644 = vunpack.c.h.b16 %v93
  %v645 = vunpack.c.l.b16 %v94
  %v646 = vunpack.c.h.b16 %v94
  %v647 = vunpack.c.l.b16 %v95
  %v648 = vunpack.c.h.b16 %v95
  %v649 = vunpack.c.l.b16 %v96
  %v650 = vunpack.c.h.b16 %v96
  %v651 = vunpack.c.l.b16 %v97
  %v652 = vunpack.c.h.b16 %v97
  %v653 = vunpack.c.l.b16 %v98
  %v654 = vunpack.c.h.b16 %v98
  %v655 = vunpack.c.l.b16 %v99
  %v656 = vunpack.c.h.b16 %v99
  %v657 = vunpack.c.l.b16 %v100
  %v658 = vunpack.c.h.b16 %v100
  %v659 = vunpack.c.l.b16 %v101
  %v660 = vunpack.c.h.b16 %v101
  %v661 = vunpack.c.l.b16 %v102
  %v662 = vunpack.c.h.b16 %v102
  %v663 = vunpack.c.l.b16 %v103
  %v664 = vunpack.c.h.b16 %v103
  %v665 = vunpack.c.l.b16 %v104
  %v666 = vunpack.c.h.b16 %v104
  %v667 = vunpack.c.l.b16 %v105
  %v668 = vunpack.c.h.b16 %v105
  %v669 = vunpack.c.l.b16 %v106
  %v670 = vunpack.c.h.b16 %v106
  %v671 = vunpack.c.l.b16 %v107
  %v672 = vunpack.c.h.b16 %v107
  %v673 = vunpack.c.l.b16 %v108
  %v674 = vunpack.c.h.b16 %v108
  %v675 = vunpack.c.l.b16 %v109
  %v676 = vunpack.c.h.b16 %v109
  %v677 = vunpack.c.l.b16 %v110
  %v678 = vunpack.c.h.b16 %v110
  %v679 = vunpack.c.l.b16 %v111
  %v680 = vunpack.c.h.b16 %v111
  %v681 = vunpack.c.l.b16 %v112
  %v682 = vunpack.c.h.b16 %v112
  %v683 = vunpack.c.l.b16 %v113
  %v684 = vunpack.c.h.b16 %v113
  %v685 = vunpack.c.l.b16 %v114
  %v686 = vunpack.c.h.b16 %v114
  %v687 = vunpack.c.l.b16 %v115
  %v688 = vunpack.c.h.b16 %v115
  %v689 = vunpack.c.l.b16 %v116
  %v690 = vunpack.c.h.b16 %v116
  %v691 = vunpack.c.l.b16 %v117
  %v692 = vunpack.c.h.b16 %v117
  %v693 = vunpack.c.l.b16 %v118
  %v694 = vunpack.c.h.b16 %v118
  %v695 = vunpack.c.l.b16 %v119
  %v696 = vunpack.c.h.b16 %v119
  %v697 = vunpack.c.l.b16 %v120
  %v698 = vunpack.c.h.b16 %v120
  %v699 = vunpack.c.l.b16 %v121
  %v700 = vunpack.c.h.b16 %v121
  %v701 = vunpack.c.l.b16 %v122
  %v702 = vunpack.c.h.b16 %v122
  %v703 = vunpack.c.l.b16 %v123
  %v704 = vunpack.c.h.b16 %v123
  %v705 = vunpack.c.l.b16 %v124
  %v706 = vunpack.c.h.b16 %v124
  %v707 = vunpack.c.l.b16 %v125
  %v708 = vunpack.c.h.b16 %v125
  %v709 = vunpack.c.l.b16 %v126
  %v710 = vunpack.c.h.b16 %v126
  %v711 = vunpack.c.l.b16 %v127
  %v712 = vunpack.c.h.b16 %v127
  %v713 = vunpack.c.l.b16 %v128
  %v714 = vunpack.c.h.b16 %v128
  %v715 = vunpack.c.l.b16 %v129
  %v716 = vunpack.c.h.b16 %v129
  %v717 = vunpack.c.l.b16 %v130
  %v718 = vunpack.c.h.b16 %v130
  %v719 = vunpack.c.l.b16 %v131
  %v720 = vunpack.c.h.b16 %v131
  %v721 = vunpack.c.l.b16 %v132
  %v722 = vunpack.c.h.b16 %v132
  %v723 = vunpack.c.l.b16 %v133
  %v724 = vunpack.c.h.b16 %v133
  %v725 = vunpack.c.l.b16 %v134
  %v726 = vunpack.c.h.b16 %v134
  %v727 = vunpack.c.l.b16 %v135
  %v728 = vunpack.c.h.b16 %v135
  %v729 = vunpack.c.l.b16 %v136
  %v730 = vunpack.c.h.b16 %v136
  %v731 = vunpack.c.l.b16 %v137
  %v732 = vunpack.c.h.b16 %v137
  %v733 = vunpack.c.l.b16 %v138
  %v734 = vunpack.c.h.b16 %v138
  %v735 = vunpack.c.l.b16 %v139
  %v736 = vunpack.c.h.b16 %v139
  %v737 = vunpack.c.l.b16 %v140
  %v738 = vunpack.c.h.b16 %v140
  %v739 = vunpack.c.l.b16 %v141
  %v740 = vunpack.c.h.b16 %v141
  %v741 = vunpack.c.l.b16 %v142
  %v742 = vunpack.c.h.b16 %v142
  %v743 = vunpack.c.l.b16 %v143
  %v744 = vunpack.c.h.b16 %v143
  %v745 = vunpack.c.l.b16 %v144
  %v746 = vunpack.c.h.b16 %v144
  %v747 = vunpack.c.l.b16 %v145
  %v748 = vunpack.c.h.b16 %v145
  %v749 = vunpack.c.l.b16 %v146
  %v750 = vunpack.c.h.b16 %v146
  %v751 = vunpack.c.l.b16 %v147
  %v752 = vunpack.c.h.b16 %v147
  %v753 = vunpack.c.l.b16 %v148
  %v754 = vunpack.c.h.b16 %v148
  %v755 = vunpack.c.l.b16 %v149
  %v756 = vunpack.c.h.b16 %v149
  %v757 = vunpack.c.l.b16 %v150
  %v758 = vunpack.c.h.b16 %v150
  %v759 = vunpack.c.l.b16 %v151
  %v760 = vunpack.c.h.b16 %v151
  %v761 = vunpack.c.l.b16 %v152
  %v762 = vunpack.c.h.b16 %v152
  %v763 = vunpack.c.l.b16 %v153
  %v764 = vunpack.c.h.b16 %v153
  %v765 = vunpack.c.l.b16 %v154
  %v766 = vunpack.c.h.b16 %v154
  %v767 = vunpack.c.l.b16 %v155
  %v768 = vunpack.c.h.b16 %v155
  %v769 = vunpack.c.l.b16 %v156
  %v770 = vunpack.c.h.b16 %v156
  %v771 = vunpack.c.l.b16 %v157
  %v772 = vunpack.c.h.b16 %v157
  %v773 = vunpack.c.l.b16 %v158
  %v774 = vunpack.c.h.b16 %v158
  %v775 = vunpack.c.l.b16 %v159
  %v776 = vunpack.c.h.b16 %v159
  %v777 = vunpack.c.l.b16 %v160
  %v778 = vunpack.c.h.b16 %v160
  %v779 = vunpack.c.l.b16 %v161
  %v780 = vunpack.c.h.b16 %v161
  %v781 = vunpack.c.l.b16 %v162
  %v782 = vunpack.c.h.b16 %v162
  %v783 = vunpack.c.l.b16 %v163
  %v784 = vunpack.c.h.b16 %v163
  %v785 = vunpack.c.l.b16 %v164
  %v786 = vunpack.c.h.b16 %v164
  %v787 = vunpack.c.l.b16 %v165
  %v788 = vunpack.c.h.b16 %v165
  %v789 = vunpack.c.l.b16 %v166
  %v790 = vunpack.c.h.b16 %v166
  %v791 = vunpack.c.l.b16 %v167
  %v792 = vunpack.c.h.b16 %v167
  %v793 = vunpack.c.l.b16 %v168
  %v794 = vunpack.c.h.b16 %v168
  %v795 = vunpack.c.l.b16 %v169
  %v796 = vunpack.c.h.b16 %v169
  %v797 = vunpack.c.l.b16 %v170
  %v798 = vunpack.c.h.b16 %v170
  %v799 = vunpack.c.l.b16 %v171
  %v800 = vunpack.c.h.b16 %v171
  %v801 = vunpack.c.l.b16 %v172
  %v802 = vunpack.c.h.b16 %v172
  %v803 = vunpack.c.l.b16 %v173
  %v804 = vunpack.c.h.b16 %v173
  %v805 = vunpack.c.l.b16 %v174
  %v806 = vunpack.c.h.b16 %v174
  %v807 = vunpack.c.l.b16 %v175
  %v808 = vunpack.c.h.b16 %v175
  %v809 = vunpack.c.l.b16 %v176
  %v810 = vunpack.c.h.b16 %v176
  %v811 = vunpack.c.l.b16 %v177
  %v812 = vunpack.c.h.b16 %v177
  %v813 = vunpack.c.l.b16 %v178
  %v814 = vunpack.c.h.b16 %v178
  %v815 = vunpack.c.l.b16 %v179
  %v816 = vunpack.c.h.b16 %v179
  %v817 = vunpack.c.l.b16 %v180
  %v818 = vunpack.c.h.b16 %v180
  %v819 = vunpack.c.l.b16 %v181
  %v820 = vunpack.c.h.b16 %v181
  %v821 = vunpack.c.l.b16 %v182
  %v822 = vunpack.c.h.b16 %v182
  %v823 = vunpack.c.l.b16 %v183
  %v824 = vunpack.c.h.b16 %v183
  %v825 = vunpack.c.l.b16 %v184
  %v826 = vunpack.c.h.b16 %v184
  %v827 = vunpack.c.l.b16 %v185
  %v828 = vunpack.c.h.b16 %v185
  %v829 = vunpack.c.l.b16 %v186
  %v830 = vunpack.c.h.b16 %v186
  %v831 = vunpack.c.l.b16 %v187
  %v832 = vunpack.c.h.b16 %v187
  %v833 = vunpack.c.l.b16 %v188
  %v834 = vunpack.c.h.b16 %v188
  %v835 = vunpack.c.l.b16 %v189
  %v836 = vunpack.c.h.b16 %v189
  %v837 = vunpack.c.l.b16 %v190
  %v838 = vunpack.c.h.b16 %v190
  %v839 = vunpack.c.l.b16 %v191
  %v840 = vunpack.c.h.b16 %v191
  %v841 = vunpack.c.l.b16 %v192
  %v842 = vunpack.c.h.b16 %v192
  %v843 = vunpack.c.l.b16 %v193
  %v844 = vunpack.c.h.b16 %v193
  %v845 = vunpack.c.l.b16 %v194
  %v846 = vunpack.c.h.b16 %v194
  %v847 = vunpack.c.l.b16 %v195
  %v848 = vunpack.c.h.b16 %v195
  %v849 = vunpack.c.l.b16 %v196
  %v850 = vunpack.c.h.b16 %v196
  %v851 = vunpack.c.l.b16 %v197
  %v852 = vunpack.c.h.b16 %v197
  %v853 = vunpack.c.l.b16 %v198
  %v854 = vunpack.c.h.b16 %v198
  %v855 = vunpack.c.l.b16 %v199
  %v856 = vunpack.c.h.b16 %v199
  %v857 = vunpack.c.l.b16 %v200
  %v858 = vunpack.c.h.b16 %v200
  %v859 = vunpack.c.l.b16 %v201
  %v860 = vunpack.c.h.b16 %v201
  %v861 = vunpack.c.l.b16 %v202
  %v862 = vunpack.c.h.b16 %v202
  %v863 = vunpack.c.l.b16 %v203
  %v864 = vunpack.c.h.b16 %v203
  %v865 = vunpack.c.l.b16 %v204
  %v866 = vunpack.c.h.b16 %v204
  %v867 = vunpack.c.l.b16 %v205
  %v868 = vunpack.c.h.b16 %v205
  %v869 = vunpack.c.l.b16 %v206
  %v870 = vunpack.c.h.b16 %v206
  %v871 = vunpack.c.l.b16 %v207
  %v872 = vunpack.c.h.b16 %v207
  %v873 = vunpack.c.l.b16 %v208
  %v874 = vunpack.c.h.b16 %v208
  %v875 = vunpack.c.l.b16 %v209
  %v876 = vunpack.c.h.b16 %v209
  %v877 = vunpack.c.l.b16 %v210
  %v878 = vunpack.c.h.b16 %v210
  %v879 = vunpack.c.l.b16 %v211
  %v880 = vunpack.c.h.b16 %v211
  %v881 = vunpack.c.l.b16 %v212
  %v882 = vunpack.c.h.b16 %v212
  %v883 = vunpack.c.l.b16 %v213
  %v884 = vunpack.c.h.b16 %v213
  %v885 = vunpack.c.l.b16 %v214
  %v886 = vunpack.c.h.b16 %v214
  %v887 = vunpack.c.l.b16 %v215
  %v888 = vunpack.c.h.b16 %v215
  %v889 = vunpack.c.l.b16 %v216
  %v890 = vunpack.c.h.b16 %v216
  %v891 = vunpack.c.l.b16 %v217
  %v892 = vunpack.c.h.b16 %v217
  %v893 = vunpack.c.l.b16 %v218
  %v894 = vunpack.c.h.b16 %v218
  %v895 = vunpack.c.l.b16 %v219
  %v896 = vunpack.c.h.b16 %v219
  %v897 = vunpack.c.l.b16 %v220
  %v898 = vunpack.c.h.b16 %v220
  %v899 = vunpack.c.l.b16 %v221
  %v900 = vunpack.c.h.b16 %v221
  %v901 = vunpack.c.l.b16 %v222
  %v902 = vunpack.c.h.b16 %v222
  %v903 = vunpack.c.l.b16 %v223
  %v904 = vunpack.c.h.b16 %v223
  %v905 = vunpack.c.l.b16 %v224
  %v906 = vunpack.c.h.b16 %v224
  %v907 = vunpack.c.l.b16 %v225
  %v908 = vunpack.c.h.b16 %v225
  %v909 = vunpack.c.l.b16 %v226
  %v910 = vunpack.c.h.b16 %v226
  %v911 = vunpack.c.l.b16 %v227
  %v912 = vunpack.c.h.b16 %v227
  %v913 = vunpack.c.l.b16 %v228
  %v914 = vunpack.c.h.b16 %v228
  %v915 = vunpack.c.l.b16 %v229
  %v916 = vunpack.c.h.b16 %v229
  %v917 = vunpack.c.l.b16 %v230
  %v918 = vunpack.c.h.b16 %v230
  %v919 = vunpack.c.l.b16 %v231
  %v920 = vunpack.c.h.b16 %v231
  %v921 = vunpack.c.l.b16 %v232
  %v922 = vunpack.c.h.b16 %v232
  %v923 = vunpack.c.l.b16 %v233
  %v924 = vunpack.c.h.b16 %v233
  %v925 = vunpack.c.l.b16 %v234
  %v926 = vunpack.c.h.b16 %v234
  %v927 = vunpack.c.l.b16 %v235
  %v928 = vunpack.c.h.b16 %v235
  %v929 = vunpack.c.l.b16 %v236
  %v930 = vunpack.c.h.b16 %v236
  %v931 = vunpack.c.l.b16 %v237
  %v932 = vunpack.c.h.b16 %v237
  %v933 = vunpack.c.l.b16 %v238
  %v934 = vunpack.c.h.b16 %v238
  %v935 = vunpack.c.l.b16 %v239
  %v936 = vunpack.c.h.b16 %v239
  %v937 = vunpack.c.l.b16 %v240
  %v938 = vunpack.c.h.b16 %v240
  %v939 = vunpack.c.l.b16 %v241
  %v940 = vunpack.c.h.b16 %v241
  %v941 = vunpack.c.l.b16 %v242
  %v942 = vunpack.c.h.b16 %v242
  %v943 = vunpack.c.l.b16 %v243
  %v944 = vunpack.c.h.b16 %v243
  %v945 = vunpack.c.l.b16 %v244
  %v946 = vunpack.c.h.b16 %v244
  %v947 = vunpack.c.l.b16 %v245
  %v948 = vunpack.c.h.b16 %v245
  %v949 = vunpack.c.l.b16 %v246
  %v950 = vunpack.c.h.b16 %v246
  %v951 = vunpack.c.l.b16 %v247
  %v952 = vunpack.c.h.b16 %v247
  %v953 = vunpack.c.l.b16 %v248
  %v954 = vunpack.c.h.b16 %v248
  %v955 = vunpack.c.l.b16 %v249
  %v956 = vunpack.c.h.b16 %v249
  %v957 = vunpack.c.l.b16 %v250
  %v958 = vunpack.c.h.b16 %v250
  %v959 = vunpack.c.l.b16 %v251
  %v960 = vunpack.c.h.b16 %v251
  %v961 = vunpack.c.l.b16 %v252
  %v962 = vunpack.c.h.b16 %v252
  %v963 = vunpack.c.l.b16 %v253
  %v964 = vunpack.c.h.b16 %v253
  %v965 = vunpack.c.l.b16 %v254
  %v966 = vunpack.c.h.b16 %v254
  %v967 = vunpack.c.l.b16 %v255
  %v968 = vunpack.c.h.b16 %v255
  %v969 = vunpack.c.l.b16 %v256
  %v970 = vunpack.c.h.b16 %v256
  %v971 = vunpack.c.l.b16 %v257
  %v972 = vunpack.c.h.b16 %v257
  %v973 = vunpack.c.l.b16 %v258
  %v974 = vunpack.c.h.b16 %v258
  %v975 = vunpack.c.l.b16 %v259
  %v976 = vunpack.c.h.b16 %v259
  %v977 = vunpack.c.l.b16 %v260
  %v978 = vunpack.c.h.b16 %v260
  %v979 = vunpack.c.l.b16 %v261
  %v980 = vunpack.c.h.b16 %v261
  %v981 = vpack.c.b16 %v537, %v533
  %v982 = vpack.c.b16 %v538, %v534
  %v983 = vpack.c.b16 %v539, %v535
  %v984 = vpack.c.b16 %v540, %v536
  %v985 = vpack.c.b16 %v545, %v541
  %v986 = vpack.c.b16 %v546, %v542
  %v987 = vpack.c.b16 %v547, %v543
  %v988 = vpack.c.b16 %v548, %v544
  %v989 = vpack.c.b16 %v553, %v549
  %v990 = vpack.c.b16 %v554, %v550
  %v991 = vpack.c.b16 %v555, %v551
  %v992 = vpack.c.b16 %v556, %v552
  %v993 = vpack.c.b16 %v561, %v557
  %v994 = vpack.c.b16 %v562, %v558
  %v995 = vpack.c.b16 %v563, %v559
  %v996 = vpack.c.b16 %v564, %v560
  %v997 = vpack.c.b16 %v569, %v565
  %v998 = vpack.c.b16 %v570, %v566
  %v999 = vpack.c.b16 %v571, %v567
  %v1000 = vpack.c.b16 %v572, %v568
  %v1001 = vpack.c.b16 %v577, %v573
  %v1002 = vpack.c.b16 %v578, %v574
  %v1003 = vpack.c.b16 %v579, %v575
  %v1004 = vpack.c.b16 %v580, %v576
  %v1005 = vpack.c.b16 %v585, %v581
  %v1006 = vpack.c.b16 %v586, %v582
  %v1007 = vpack.c.b16 %v587, %v583
  %v1008 = vpack.c.b16 %v588, %v584
  %v1009 = vpack.c.b16 %v593, %v589
  %v1010 = vpack.c.b16 %v594, %v590
  %v1011 = vpack.c.b16 %v595, %v591
  %v1012 = vpack.c.b16 %v596, %v592
  %v1013 = vpack.c.b16 %v601, %v597
  %v1014 = vpack.c.b16 %v602, %v598
  %v1015 = vpack.c.b16 %v603, %v599
  %v1016 = vpack.c.b16 %v604, %v600
  %v1017 = vpack.c.b16 %v609, %v605
  %v1018 = vpack.c.b16 %v610, %v606
  %v1019 = vpack.c.b16 %v611, %v607
  %v1020 = vpack.c.b16 %v612, %v608
  %v1021 = vpack.c.b16 %v617, %v613
  %v1022 = vpack.c.b16 %v618, %v614
  %v1023 = vpack.c.b16 %v619, %v615
  %v1024 = vpack.c.b16 %v620, %v616
  %v1025 = vpack.c.b16 %v625, %v621
  %v1026 = vpack.c.b16 %v626, %v622
  %v1027 = vpack.c.b16 %v627, %v623
  %v1028 = vpack.c.b16 %v628, %v624
  %v1029 = vpack.c.b16 %v633, %v629
  %v1030 = vpack.c.b16 %v634, %v630
  %v1031 = vpack.c.b16 %v635, %v631
  %v1032 = vpack.c.b16 %v636, %v632
  %v1033 = vpack.c.b16 %v641, %v637
  %v1034 = vpack.c.b16 %v642, %v638
  %v1035 = vpack.c.b16 %v643, %v639
  %v1036 = vpack.c.b16 %v644, %v640
  %v1037 = vpack.c.b16 %v649, %v645
  %v1038 = vpack.c.b16 %v650, %v646
  %v1039 = vpack.c.b16 %v651, %v647
  %v1040 = vpack.c.b16 %v652, %v648
  %v1041 = vpack.c.b16 %v657, %v653
  %v1042 = vpack.c.b16 %v658, %v654
  %v1043 = vpack.c.b16 %v659, %v655
  %v1044 = vpack.c.b16 %v660, %v656
  %v1045 = vpack.c.b16 %v665, %v661
  %v1046 = vpack.c.b16 %v666, %v662
  %v1047 = vpack.c.b16 %v667, %v663
  %v1048 = vpack.c.b16 %v668, %v664
  %v1049 = vpack.c.b16 %v673, %v669
  %v1050 = vpack.c.b16 %v674, %v670
  %v1051 = vpack.c.b16 %v675, %v671
  %v1052 = vpack.c.b16 %v676, %v672
  %v1053 = vpack.c.b16 %v681, %v677
  %v1054 = vpack.c.b16 %v682, %v678
  %v1055 = vpack.c.b16 %v683, %v679
  %v1056 = vpack.c.b16 %v684, %v680
  %v1057 = vpack.c.b16 %v689, %v685
  %v1058 = vpack.c.b16 %v690, %v686
  %v1059 = vpack.c.b16 %v691, %v687
  %v1060 = vpack.c.b16 %v692, %v688
  %v1061 = vpack.c.b16 %v697, %v693
  %v1062 = vpack.c.b16 %v698, %v694
  %v1063 = vpack.c.b16 %v699, %v695
  %v1064 = vpack.c.b16 %v700, %v696
  %v1065 = vpack.c.b16 %v705, %v701
  %v1066 = vpack.c.b16 %v706, %v702
  %v1067 = vpack.c.b16 %v707, %v703
  %v1068 = vpack.c.b16 %v708, %v704
  %v1069 = vpack.c.b16 %v713, %v709
  %v1070 = vpack.c.b16 %v714, %v710
  %v1071 = vpack.c.b16 %v715, %v711
  %v1072 = vpack.c.b16 %v716, %v712
  %v1073 = vpack.c.b16 %v721, %v717
  %v1074 = vpack.c.b16 %v722, %v718
  %v1075 = vpack.c.b16 %v723, %v719
  %v1076 = vpack.c.b16 %v724, %v720
  %v1077 = vpack.c.b16 %v729, %v725
  %v1078 = vpack.c.b16 %v730, %v726
  %v1079 = vpack.c.b16 %v731, %v727
  %v1080 = vpack.c.b16 %v732, %v728
  %v1081 = vpack.c.b16 %v737, %v733
  %v1082 = vpack.c.b16 %v738, %v734
  %v1083 = vpack.c.b16 %v739, %v735
  %v1084 = vpack.c.b16 %v740, %v736
  %v1085 = vpack.c.b16 %v745, %v741
  %v1086 = vpack.c.b16 %v746, %v742
  %v1087 = vpack.c.b16 %v747, %v743
  %v1088 = vpack.c.b16 %v748, %v744
  %v1089 = vpack.c.b16 %v753, %v749
  %v1090 = vpack.c.b16 %v754, %v750
  %v1091 = vpack.c.b16 %v755, %v751
  %v1092 = vpack.c.b16 %v756, %v752
  %v1093 = vpack.c.b16 %v761, %v757
  %v1094 = vpack.c.b16 %v762, %v758
  %v1095 = vpack.c.b16 %v763, %v759
  %v1096 = vpack.c.b16 %v764, %v760
  %v1097 = vpack.c.b16 %v769, %v765
  %v1098 = vpack.c.b16 %v770, %v766
  %v1099 = vpack.c.b16 %v771, %v767
  %v1100 = vpack.c.b16 %v772, %v768
  %v1101 = vpack.c.b16 %v777, %v773
  %v1102 = vpack.c.b16 %v778, %v774
  %v1103 = vpack.c.b16 %v779, %v775
  %v1104 = vpack.c.b16 %v780, %v776
  %v1105 = vpack.c.b16 %v785, %v781
  %v1106 = vpack.c.b16 %v786, %v782
  %v1107 = vpack.c.b16 %v787, %v783
  %v1108 = vpack.c.b16 %v788, %v784
  %v1109 = vpack.c.b16 %v793, %v789
  %v1110 = vpack.c.b16 %v794, %v790
  %v1111 = vpack.c.b16 %v795, %v791
  %v1112 = vpack.c.b16 %v796, %v792
  %v1113 = vpack.c.b16 %v801, %v797
  %v1114 = vpack.c.b16 %v802, %v798
  %v1115 = vpack.c.b16 %v803, %v799
  %v1116 = vpack.c.b16 %v804, %v800
  %v1117 = vpack.c.b16 %v809, %v805
  %v1118 = vpack.c.b16 %v810, %v806
  %v1119 = vpack.c.b16 %v811, %v807
  %v1120 = vpack.c.b16 %v812, %v808
  %v1121 = vpack.c.b16 %v817, %v813
  %v1122 = vpack.c.b16 %v818, %v814
  %v1123 = vpack.c.b16 %v819, %v815
  %v1124 = vpack.c.b16 %v820, %v816
  %v1125 = vpack.c.b16 %v825, %v821
  %v1126 = vpack.c.b16 %v826, %v822
  %v1127 = vpack.c.b16 %v827, %v823
  %v1128 = vpack.c.b16 %v828, %v824
  %v1129 = vpack.c.b16 %v833, %v829
  %v1130 = vpack.c.b16 %v834, %v830
  %v1131 = vpack.c.b16 %v835, %v831
  %v1132 = vpack.c.b16 %v836, %v832
  %v1133 = vpack.c.b16 %v841, %v837
  %v1134 = vpack.c.b16 %v842, %v838
  %v1135 = vpack.c.b16 %v843, %v839
  %v1136 = vpack.c.b16 %v844, %v840
  %v1137 = vpack.c.b16 %v849, %v845
  %v1138 = vpack.c.b16 %v850, %v846
  %v1139 = vpack.c.b16 %v851, %v847
  %v1140 = vpack.c.b16 %v852, %v848
  %v1141 = vpack.c.b16 %v857, %v853
  %v1142 = vpack.c.b16 %v858, %v854
  %v1143 = vpack.c.b16 %v859, %v855
  %v1144 = vpack.c.b16 %v860, %v856
  %v1145 = vpack.c.b16 %v865, %v861
  %v1146 = vpack.c.b16 %v866, %v862
  %v1147 = vpack.c.b16 %v867, %v863
  %v1148 = vpack.c.b16 %v868, %v864
  %v1149 = vpack.c.b16 %v873, %v869
  %v1150 = vpack.c.b16 %v874, %v870
  %v1151 = vpack.c.b16 %v875, %v871
  %v1152 = vpack.c.b16 %v876, %v872
  %v1153 = vpack.c.b16 %v881, %v877
  %v1154 = vpack.c.b16 %v882, %v878
  %v1155 = vpack.c.b16 %v883, %v879
  %v1156 = vpack.c.b16 %v884, %v880
  %v1157 = vpack.c.b16 %v889, %v885
  %v1158 = vpack.c.b16 %v890, %v886
  %v1159 = vpack.c.b16 %v891, %v887
  %v1160 = vpack.c.b16 %v892, %v888
  %v1161 = vpack.c.b16 %v897, %v893
  %v1162 = vpack.c.b16 %v898, %v894
  %v1163 = vpack.c.b16 %v899, %v895
  %v1164 = vpack.c.b16 %v900, %v896
  %v1165 = vpack.c.b16 %v905, %v901
  %v1166 = vpack.c.b16 %v906, %v902
  %v1167 = vpack.c.b16 %v907, %v903
  %v1168 = vpack.c.b16 %v908, %v904
  %v1169 = vpack.c.b16 %v913, %v909
  %v1170 = vpack.c.b16 %v914, %v910
  %v1171 = vpack.c.b16 %v915, %v911
  %v1172 = vpack.c.b16 %v916, %v912
  %v1173 = vpack.c.b16 %v921, %v917
  %v1174 = vpack.c.b16 %v922, %v918
  %v1175 = vpack.c.b16 %v923, %v919
  %v1176 = vpack.c.b16 %v924, %v920
  %v1177 = vpack.c.b16 %v929, %v925
  %v1178 = vpack.c.b16 %v930, %v926
  %v1179 = vpack.c.b16 %v931, %v927
  %v1180 = vpack.c.b16 %v932, %v928
  %v1181 = vpack.c.b16 %v937, %v933
  %v1182 = vpack.c.b16 %v938, %v934
  %v1183 = vpack.c.b16 %v939, %v935
  %v1184 = vpack.c.b16 %v940, %v936
  %v1185 = vpack.c.b16 %v945, %v941
  %v1186 = vpack.c.b16 %v946, %v942
  %v1187 = vpack.c.b16 %v947, %v943
  %v1188 = vpack.c.b16 %v948, %v944
  %v1189 = vpack.c.b16 %v953, %v949
  %v1190 = vpack.c.b16 %v954, %v950
  %v1191 = vpack.c.b16 %v955, %v951
  %v1192 = vpack.c.b16 %v956, %v952
  %v1193 = vpack.c.b16 %v961, %v957
  %v1194 = vpack.c.b16 %v962, %v958
  %v1195 = vpack.c.b16 %v963, %v959
  %v1196 = vpack.c.b16 %v964, %v960
  %v1197 = vpack.c.b16 %v969, %v965
  %v1198 = vpack.c.b16 %v970, %v966
  %v1199 = vpack.c.b16 %v971, %v967
  %v1200 = vpack.c.b16 %v972, %v968
  %v1201 = vpack.c.b16 %v977, %v973
  %v1202 = vpack.c.b16 %v978, %v974
  %v1203 = vpack.c.b16 %v979, %v975
  %v1204 = vpack.c.b16 %v980, %v976
  %1429 = vmatprep.subr.bf16.mxu0 %v1010
  %1430 = vmatpush1.bf16.msra.mxu0 %v1009
  %1431 = vmatprep.subr.bf16.mxu0 %v1006
  %1432 = vmatpush1.bf16.msra.mxu0 %v1005
  %1433 = vmatprep.subr.bf16.mxu0 %v1002
  %1434 = vmatpush1.bf16.msra.mxu0 %v1001
  %1435 = vmatprep.subr.bf16.mxu0 %v998
  %1436 = vmatpush1.bf16.msra.mxu0 %v997
  %1437 = vmatprep.subr.bf16.mxu0 %v994
  %1438 = vmatpush1.bf16.msra.mxu0 %v993
  %1439 = vmatprep.subr.bf16.mxu0 %v990
  %1440 = vmatpush1.bf16.msra.mxu0 %v989
  %1441 = vmatprep.subr.bf16.mxu0 %v986
  %1442 = vmatpush1.bf16.msra.mxu0 %v985
  %1443 = vmatprep.subr.bf16.mxu0 %v982
  %1444 = vmatpush1.bf16.msra.mxu0 %v981
  %1445 = vmatprep.subr.bf16.mxu0 %v1042
  %1446 = vmatpush2.bf16.msra.mxu0 %v1041
  %1447 = vmatprep.subr.bf16.mxu0 %v1038
  %1448 = vmatpush2.bf16.msra.mxu0 %v1037
  %1449 = vmatprep.subr.bf16.mxu0 %v1034
  %1450 = vmatpush2.bf16.msra.mxu0 %v1033
  %1451 = vmatprep.subr.bf16.mxu0 %v1030
  %1452 = vmatpush2.bf16.msra.mxu0 %v1029
  %1453 = vmatprep.subr.bf16.mxu0 %v1026
  %1454 = vmatpush2.bf16.msra.mxu0 %v1025
  %1455 = vmatprep.subr.bf16.mxu0 %v1022
  %1456 = vmatpush2.bf16.msra.mxu0 %v1021
  %1457 = vmatprep.subr.bf16.mxu0 %v1018
  %1458 = vmatpush2.bf16.msra.mxu0 %v1017
  %1459 = vmatprep.subr.bf16.mxu0 %v1014
  %1460 = vmatpush2.bf16.msra.mxu0 %v1013
  %1461 = vmatprep.mubr.bf16.mxu0 %v296
  %1462 = vmatmul.mubr.bf16.gmra.mxu0 %v295
  %v1463 = vpop.f32.mrf.mxu0
  %v1464 = vadd.f32 %v267, %v1463
  %v1465 = vpop.f32.mrf.mxu0
  %v1466 = vadd.f32 %v271, %v1465
  %v1467 = vpop.f32.mrf.mxu0
  %v1468 = vpop.f32.mrf.mxu0
  %1469 = vdwg.mxu0
  %1470 = vmatprep.subr.bf16.mxu0 %v1074
  %1471 = vmatpush1.bf16.msra.mxu0 %v1073
  %1472 = vmatprep.subr.bf16.mxu0 %v1070
  %1473 = vmatpush1.bf16.msra.mxu0 %v1069
  %1474 = vmatprep.subr.bf16.mxu0 %v1066
  %1475 = vmatpush1.bf16.msra.mxu0 %v1065
  %1476 = vmatprep.subr.bf16.mxu0 %v1062
  %1477 = vmatpush1.bf16.msra.mxu0 %v1061
  %1478 = vmatprep.subr.bf16.mxu0 %v1058
  %1479 = vmatpush1.bf16.msra.mxu0 %v1057
  %1480 = vmatprep.subr.bf16.mxu0 %v1054
  %1481 = vmatpush1.bf16.msra.mxu0 %v1053
  %1482 = vmatprep.subr.bf16.mxu0 %v1050
  %1483 = vmatpush1.bf16.msra.mxu0 %v1049
  %1484 = vmatprep.subr.bf16.mxu0 %v1046
  %1485 = vmatpush1.bf16.msra.mxu0 %v1045
  %1486 = vmatprep.subr.bf16.mxu0 %v1106
  %1487 = vmatpush2.bf16.msra.mxu0 %v1105
  %1488 = vmatprep.subr.bf16.mxu0 %v1102
  %1489 = vmatpush2.bf16.msra.mxu0 %v1101
  %1490 = vmatprep.subr.bf16.mxu0 %v1098
  %1491 = vmatpush2.bf16.msra.mxu0 %v1097
  %1492 = vmatprep.subr.bf16.mxu0 %v1094
  %1493 = vmatpush2.bf16.msra.mxu0 %v1093
  %1494 = vmatprep.subr.bf16.mxu0 %v1090
  %1495 = vmatpush2.bf16.msra.mxu0 %v1089
  %1496 = vmatprep.subr.bf16.mxu0 %v1086
  %1497 = vmatpush2.bf16.msra.mxu0 %v1085
  %1498 = vmatprep.subr.bf16.mxu0 %v1082
  %1499 = vmatpush2.bf16.msra.mxu0 %v1081
  %1500 = vmatprep.subr.bf16.mxu0 %v1078
  %1501 = vmatpush2.bf16.msra.mxu0 %v1077
  %1502 = vmatprep.mubr.bf16.mxu0 %v298
  %1503 = vmatmul.mubr.bf16.gmra.mxu0 %v297
  %v1504 = vpop.f32.mrf.mxu0
  %v1505 = vadd.f32 %v1464, %v1504
  %v1506 = vpop.f32.mrf.mxu0
  %v1507 = vadd.f32 %v1466, %v1506
  %v1508 = vpop.f32.mrf.mxu0
  %v1509 = vpop.f32.mrf.mxu0
  %1510 = vdwg.mxu0
  %1511 = vmatprep.subr.bf16.mxu0 %v1138
  %1512 = vmatpush1.bf16.msra.mxu0 %v1137
  %1513 = vmatprep.subr.bf16.mxu0 %v1134
  %1514 = vmatpush1.bf16.msra.mxu0 %v1133
  %1515 = vmatprep.subr.bf16.mxu0 %v1130
  %1516 = vmatpush1.bf16.msra.mxu0 %v1129
  %1517 = vmatprep.subr.bf16.mxu0 %v1126
  %1518 = vmatpush1.bf16.msra.mxu0 %v1125
  %1519 = vmatprep.subr.bf16.mxu0 %v1122
  %1520 = vmatpush1.bf16.msra.mxu0 %v1121
  %1521 = vmatprep.subr.bf16.mxu0 %v1118
  %1522 = vmatpush1.bf16.msra.mxu0 %v1117
  %1523 = vmatprep.subr.bf16.mxu0 %v1114
  %1524 = vmatpush1.bf16.msra.mxu0 %v1113
  %1525 = vmatprep.subr.bf16.mxu0 %v1110
  %1526 = vmatpush1.bf16.msra.mxu0 %v1109
  %1527 = vmatprep.subr.bf16.mxu0 %v1170
  %1528 = vmatpush2.bf16.msra.mxu0 %v1169
  %1529 = vmatprep.subr.bf16.mxu0 %v1166
  %1530 = vmatpush2.bf16.msra.mxu0 %v1165
  %1531 = vmatprep.subr.bf16.mxu0 %v1162
  %1532 = vmatpush2.bf16.msra.mxu0 %v1161
  %1533 = vmatprep.subr.bf16.mxu0 %v1158
  %1534 = vmatpush2.bf16.msra.mxu0 %v1157
  %1535 = vmatprep.subr.bf16.mxu0 %v1154
  %1536 = vmatpush2.bf16.msra.mxu0 %v1153
  %1537 = vmatprep.subr.bf16.mxu0 %v1150
  %1538 = vmatpush2.bf16.msra.mxu0 %v1149
  %1539 = vmatprep.subr.bf16.mxu0 %v1146
  %1540 = vmatpush2.bf16.msra.mxu0 %v1145
  %1541 = vmatprep.subr.bf16.mxu0 %v1142
  %1542 = vmatpush2.bf16.msra.mxu0 %v1141
  %1543 = vmatprep.mubr.bf16.mxu0 %v300
  %1544 = vmatmul.mubr.bf16.gmra.mxu0 %v299
  %v1545 = vpop.f32.mrf.mxu0
  %v1546 = vadd.f32 %v1505, %v1545
  %v1547 = vpop.f32.mrf.mxu0
  %v1548 = vadd.f32 %v1507, %v1547
  %v1549 = vpop.f32.mrf.mxu0
  %v1550 = vpop.f32.mrf.mxu0
  %1551 = vdwg.mxu0
  %1552 = vmatprep.subr.bf16.mxu0 %v1202
  %1553 = vmatpush1.bf16.msra.mxu0 %v1201
  %1554 = vmatprep.subr.bf16.mxu0 %v1198
  %1555 = vmatpush1.bf16.msra.mxu0 %v1197
  %1556 = vmatprep.subr.bf16.mxu0 %v1194
  %1557 = vmatpush1.bf16.msra.mxu0 %v1193
  %1558 = vmatprep.subr.bf16.mxu0 %v1190
  %1559 = vmatpush1.bf16.msra.mxu0 %v1189
  %1560 = vmatprep.subr.bf16.mxu0 %v1186
  %1561 = vmatpush1.bf16.msra.mxu0 %v1185
  %1562 = vmatprep.subr.bf16.mxu0 %v1182
  %1563 = vmatpush1.bf16.msra.mxu0 %v1181
  %1564 = vmatprep.subr.bf16.mxu0 %v1178
  %1565 = vmatpush1.bf16.msra.mxu0 %v1177
  %1566 = vmatprep.subr.bf16.mxu0 %v1174
  %1567 = vmatpush1.bf16.msra.mxu0 %v1173
  %1568 = vmatprep.subr.bf16.mxu0 0
  %1569 = vmatpush2.bf16.msra.mxu0 0
  %1570 = vmatprep.subr.bf16.mxu0 0
  %1571 = vmatpush2.bf16.msra.mxu0 0
  %1572 = vmatprep.subr.bf16.mxu0 0
  %1573 = vmatpush2.bf16.msra.mxu0 0
  %1574 = vmatprep.subr.bf16.mxu0 0
  %1575 = vmatpush2.bf16.msra.mxu0 0
  %1576 = vmatprep.subr.bf16.mxu0 0
  %1577 = vmatpush2.bf16.msra.mxu0 0
  %1578 = vmatprep.subr.bf16.mxu0 0
  %1579 = vmatpush2.bf16.msra.mxu0 0
  %1580 = vmatprep.subr.bf16.mxu0 0
  %1581 = vmatpush2.bf16.msra.mxu0 0
  %1582 = vmatprep.subr.bf16.mxu0 0
  %1583 = vmatpush2.bf16.msra.mxu0 0
  %1584 = vmatprep.mubr.bf16.mxu0 0
  %1585 = vmatmul.mubr.bf16.gmra.mxu0 %v301
  %v1586 = vpop.f32.mrf.mxu0
  %v1587 = vadd.f32 %v1546, %v1586
  %v1588 = vpop.f32.mrf.mxu0
  %v1589 = vadd.f32 %v1548, %v1588
  %v1590 = vpop.f32.mrf.mxu0
  %v1591 = vpop.f32.mrf.mxu0
  %1592 = vdwg.mxu0
  %1593 = vmatprep.subr.bf16.mxu0 %v1012
  %1594 = vmatpush1.bf16.msra.mxu0 %v1011
  %1595 = vmatprep.subr.bf16.mxu0 %v1008
  %1596 = vmatpush1.bf16.msra.mxu0 %v1007
  %1597 = vmatprep.subr.bf16.mxu0 %v1004
  %1598 = vmatpush1.bf16.msra.mxu0 %v1003
  %1599 = vmatprep.subr.bf16.mxu0 %v1000
  %1600 = vmatpush1.bf16.msra.mxu0 %v999
  %1601 = vmatprep.subr.bf16.mxu0 %v996
  %1602 = vmatpush1.bf16.msra.mxu0 %v995
  %1603 = vmatprep.subr.bf16.mxu0 %v992
  %1604 = vmatpush1.bf16.msra.mxu0 %v991
  %1605 = vmatprep.subr.bf16.mxu0 %v988
  %1606 = vmatpush1.bf16.msra.mxu0 %v987
  %1607 = vmatprep.subr.bf16.mxu0 %v984
  %1608 = vmatpush1.bf16.msra.mxu0 %v983
  %1609 = vmatprep.subr.bf16.mxu0 %v1044
  %1610 = vmatpush2.bf16.msra.mxu0 %v1043
  %1611 = vmatprep.subr.bf16.mxu0 %v1040
  %1612 = vmatpush2.bf16.msra.mxu0 %v1039
  %1613 = vmatprep.subr.bf16.mxu0 %v1036
  %1614 = vmatpush2.bf16.msra.mxu0 %v1035
  %1615 = vmatprep.subr.bf16.mxu0 %v1032
  %1616 = vmatpush2.bf16.msra.mxu0 %v1031
  %1617 = vmatprep.subr.bf16.mxu0 %v1028
  %1618 = vmatpush2.bf16.msra.mxu0 %v1027
  %1619 = vmatprep.subr.bf16.mxu0 %v1024
  %1620 = vmatpush2.bf16.msra.mxu0 %v1023
  %1621 = vmatprep.subr.bf16.mxu0 %v1020
  %1622 = vmatpush2.bf16.msra.mxu0 %v1019
  %1623 = vmatprep.subr.bf16.mxu0 %v1016
  %1624 = vmatpush2.bf16.msra.mxu0 %v1015
  %1625 = vmatprep.mubr.bf16.mxu0 %v296
  %1626 = vmatmul.mubr.bf16.gmra.mxu0 %v295
  %v1627 = vpop.f32.mrf.mxu0
  %v1628 = vadd.f32 %v275, %v1627
  %v1629 = vpop.f32.mrf.mxu0
  %v1630 = vadd.f32 %v279, %v1629
  %v1631 = vpop.f32.mrf.mxu0
  %v1632 = vpop.f32.mrf.mxu0
  %1633 = vdwg.mxu0
  %1634 = vmatprep.subr.bf16.mxu0 %v1076
  %1635 = vmatpush1.bf16.msra.mxu0 %v1075
  %1636 = vmatprep.subr.bf16.mxu0 %v1072
  %1637 = vmatpush1.bf16.msra.mxu0 %v1071
  %1638 = vmatprep.subr.bf16.mxu0 %v1068
  %1639 = vmatpush1.bf16.msra.mxu0 %v1067
  %1640 = vmatprep.subr.bf16.mxu0 %v1064
  %1641 = vmatpush1.bf16.msra.mxu0 %v1063
  %1642 = vmatprep.subr.bf16.mxu0 %v1060
  %1643 = vmatpush1.bf16.msra.mxu0 %v1059
  %1644 = vmatprep.subr.bf16.mxu0 %v1056
  %1645 = vmatpush1.bf16.msra.mxu0 %v1055
  %1646 = vmatprep.subr.bf16.mxu0 %v1052
  %1647 = vmatpush1.bf16.msra.mxu0 %v1051
  %1648 = vmatprep.subr.bf16.mxu0 %v1048
  %1649 = vmatpush1.bf16.msra.mxu0 %v1047
  %1650 = vmatprep.subr.bf16.mxu0 %v1108
  %1651 = vmatpush2.bf16.msra.mxu0 %v1107
  %1652 = vmatprep.subr.bf16.mxu0 %v1104
  %1653 = vmatpush2.bf16.msra.mxu0 %v1103
  %1654 = vmatprep.subr.bf16.mxu0 %v1100
  %1655 = vmatpush2.bf16.msra.mxu0 %v1099
  %1656 = vmatprep.subr.bf16.mxu0 %v1096
  %1657 = vmatpush2.bf16.msra.mxu0 %v1095
  %1658 = vmatprep.subr.bf16.mxu0 %v1092
  %1659 = vmatpush2.bf16.msra.mxu0 %v1091
  %1660 = vmatprep.subr.bf16.mxu0 %v1088
  %1661 = vmatpush2.bf16.msra.mxu0 %v1087
  %1662 = vmatprep.subr.bf16.mxu0 %v1084
  %1663 = vmatpush2.bf16.msra.mxu0 %v1083
  %1664 = vmatprep.subr.bf16.mxu0 %v1080
  %1665 = vmatpush2.bf16.msra.mxu0 %v1079
  %1666 = vmatprep.mubr.bf16.mxu0 %v298
  %1667 = vmatmul.mubr.bf16.gmra.mxu0 %v297
  %v1668 = vpop.f32.mrf.mxu0
  %v1669 = vadd.f32 %v1628, %v1668
  %v1670 = vpop.f32.mrf.mxu0
  %v1671 = vadd.f32 %v1630, %v1670
  %v1672 = vpop.f32.mrf.mxu0
  %v1673 = vpop.f32.mrf.mxu0
  %1674 = vdwg.mxu0
  %1675 = vmatprep.subr.bf16.mxu0 %v1140
  %1676 = vmatpush1.bf16.msra.mxu0 %v1139
  %1677 = vmatprep.subr.bf16.mxu0 %v1136
  %1678 = vmatpush1.bf16.msra.mxu0 %v1135
  %1679 = vmatprep.subr.bf16.mxu0 %v1132
  %1680 = vmatpush1.bf16.msra.mxu0 %v1131
  %1681 = vmatprep.subr.bf16.mxu0 %v1128
  %1682 = vmatpush1.bf16.msra.mxu0 %v1127
  %1683 = vmatprep.subr.bf16.mxu0 %v1124
  %1684 = vmatpush1.bf16.msra.mxu0 %v1123
  %1685 = vmatprep.subr.bf16.mxu0 %v1120
  %1686 = vmatpush1.bf16.msra.mxu0 %v1119
  %1687 = vmatprep.subr.bf16.mxu0 %v1116
  %1688 = vmatpush1.bf16.msra.mxu0 %v1115
  %1689 = vmatprep.subr.bf16.mxu0 %v1112
  %1690 = vmatpush1.bf16.msra.mxu0 %v1111
  %1691 = vmatprep.subr.bf16.mxu0 %v1172
  %1692 = vmatpush2.bf16.msra.mxu0 %v1171
  %1693 = vmatprep.subr.bf16.mxu0 %v1168
  %1694 = vmatpush2.bf16.msra.mxu0 %v1167
  %1695 = vmatprep.subr.bf16.mxu0 %v1164
  %1696 = vmatpush2.bf16.msra.mxu0 %v1163
  %1697 = vmatprep.subr.bf16.mxu0 %v1160
  %1698 = vmatpush2.bf16.msra.mxu0 %v1159
  %1699 = vmatprep.subr.bf16.mxu0 %v1156
  %1700 = vmatpush2.bf16.msra.mxu0 %v1155
  %1701 = vmatprep.subr.bf16.mxu0 %v1152
  %1702 = vmatpush2.bf16.msra.mxu0 %v1151
  %1703 = vmatprep.subr.bf16.mxu0 %v1148
  %1704 = vmatpush2.bf16.msra.mxu0 %v1147
  %1705 = vmatprep.subr.bf16.mxu0 %v1144
  %1706 = vmatpush2.bf16.msra.mxu0 %v1143
  %1707 = vmatprep.mubr.bf16.mxu0 %v300
  %1708 = vmatmul.mubr.bf16.gmra.mxu0 %v299
  %v1709 = vpop.f32.mrf.mxu0
  %v1710 = vadd.f32 %v1669, %v1709
  %v1711 = vpop.f32.mrf.mxu0
  %v1712 = vadd.f32 %v1671, %v1711
  %v1713 = vpop.f32.mrf.mxu0
  %v1714 = vpop.f32.mrf.mxu0
  %1715 = vdwg.mxu0
  %1716 = vmatprep.subr.bf16.mxu0 %v1204
  %1717 = vmatpush1.bf16.msra.mxu0 %v1203
  %1718 = vmatprep.subr.bf16.mxu0 %v1200
  %1719 = vmatpush1.bf16.msra.mxu0 %v1199
  %1720 = vmatprep.subr.bf16.mxu0 %v1196
  %1721 = vmatpush1.bf16.msra.mxu0 %v1195
  %1722 = vmatprep.subr.bf16.mxu0 %v1192
  %1723 = vmatpush1.bf16.msra.mxu0 %v1191
  %1724 = vmatprep.subr.bf16.mxu0 %v1188
  %1725 = vmatpush1.bf16.msra.mxu0 %v1187
  %1726 = vmatprep.subr.bf16.mxu0 %v1184
  %1727 = vmatpush1.bf16.msra.mxu0 %v1183
  %1728 = vmatprep.subr.bf16.mxu0 %v1180
  %1729 = vmatpush1.bf16.msra.mxu0 %v1179
  %1730 = vmatprep.subr.bf16.mxu0 %v1176
  %1731 = vmatpush1.bf16.msra.mxu0 %v1175
  %1732 = vmatprep.subr.bf16.mxu0 0
  %1733 = vmatpush2.bf16.msra.mxu0 0
  %1734 = vmatprep.subr.bf16.mxu0 0
  %1735 = vmatpush2.bf16.msra.mxu0 0
  %1736 = vmatprep.subr.bf16.mxu0 0
  %1737 = vmatpush2.bf16.msra.mxu0 0
  %1738 = vmatprep.subr.bf16.mxu0 0
  %1739 = vmatpush2.bf16.msra.mxu0 0
  %1740 = vmatprep.subr.bf16.mxu0 0
  %1741 = vmatpush2.bf16.msra.mxu0 0
  %1742 = vmatprep.subr.bf16.mxu0 0
  %1743 = vmatpush2.bf16.msra.mxu0 0
  %1744 = vmatprep.subr.bf16.mxu0 0
  %1745 = vmatpush2.bf16.msra.mxu0 0
  %1746 = vmatprep.subr.bf16.mxu0 0
  %1747 = vmatpush2.bf16.msra.mxu0 0
  %1748 = vmatprep.mubr.bf16.mxu0 0
  %1749 = vmatmul.mubr.bf16.gmra.mxu0 %v301
  %v1750 = vpop.f32.mrf.mxu0
  %v1751 = vadd.f32 %v1710, %v1750
  %v1752 = vpop.f32.mrf.mxu0
  %v1753 = vadd.f32 %v1712, %v1752
  %v1754 = vpop.f32.mrf.mxu0
  %v1755 = vpop.f32.mrf.mxu0
  %1756 = vdwg.mxu0
  %vm1757 = vcmp.ge.f32.partialorder %v1587, 0.0
  %vm1758 = vcmp.ge.f32.partialorder %v1589, 0.0
  %vm1759 = vcmp.ge.f32.partialorder %v1751, 0.0
  %vm1760 = vcmp.ge.f32.partialorder %v1753, 0.0
  %v1761 = vmul.f32 %v1587, 0.2
  %v1762 = vmul.f32 %v1589, 0.2
  %v1763 = vmul.f32 %v1751, 0.2
  %v1764 = vmul.f32 %v1753, 0.2
  %v1765 = vsel %vm1757, %v1587, %v1761
  %v1766 = vsel %vm1758, %v1589, %v1762
  %v1767 = vsel %vm1759, %v1751, %v1763
  %v1768 = vsel %vm1760, %v1753, %v1764
  %v1769 = vpack.c.bf16 %v1765, %v1765
  %v1770 = vpack.c.bf16 %v1766, %v1766
  %v1771 = vpack.c.bf16 %v1767, %v1767
  %v1772 = vpack.c.bf16 %v1768, %v1768
  %v1773 = vld [vmem:[%s3] sm:$0xff]
  %v1774 = vld [vmem:[%s3 + $0x8] sm:$0xff]
  %v1775 = vld [vmem:[%s3 + $0x10] sm:$0xff]
  %v1776 = vld [vmem:[%s3 + $0x18] sm:$0xff]
  %v1777 = vld [vmem:[%s3 + $0x20] sm:$0xff]
  %v1778 = vld [vmem:[%s3 + $0x28] sm:$0xff]
  %v1779 = vld [vmem:[%s3 + $0x30] sm:$0xff]
  %v1780 = vld [vmem:[%s3 + $0x38] sm:$0xff]
  %v1781 = vld [vmem:[%s3 + $0x40] sm:$0xff]
  %v1782 = vld [vmem:[%s3 + $0x48] sm:$0xff]
  %v1783 = vld [vmem:[%s3 + $0x50] sm:$0xff]
  %v1784 = vld [vmem:[%s3 + $0x58] sm:$0xff]
  %v1785 = vld [vmem:[%s3 + $0x60] sm:$0xff]
  %v1786 = vld [vmem:[%s3 + $0x68] sm:$0xff]
  %v1787 = vld [vmem:[%s3 + $0x70] sm:$0xff]
  %v1788 = vld [vmem:[%s3 + $0x78] sm:$0xff]
  %v1789 = vld [vmem:[%s3 + $0x80] sm:$0xff]
  %v1790 = vld [vmem:[%s3 + $0x88] sm:$0xff]
  %v1791 = vld [vmem:[%s3 + $0x90] sm:$0xff]
  %v1792 = vld [vmem:[%s3 + $0x98] sm:$0xff]
  %v1793 = vld [vmem:[%s3 + $0xa0] sm:$0xff]
  %v1794 = vld [vmem:[%s3 + $0xa8] sm:$0xff]
  %v1795 = vld [vmem:[%s3 + $0xb0] sm:$0xff]
  %v1796 = vld [vmem:[%s3 + $0xb8] sm:$0xff]
  %v1797 = vld [vmem:[%s3 + $0xc0] sm:$0xff]
  %v1798 = vld [vmem:[%s3 + $0xc8] sm:$0xff]
  %v1799 = vld [vmem:[%s3 + $0xd0] sm:$0xff]
  %v1800 = vld [vmem:[%s3 + $0xd8] sm:$0xff]
  %v1801 = vld [vmem:[%s3 + $0xe0] sm:$0xff]
  %v1802 = vld [vmem:[%s3 + $0xe8] sm:$0xff]
  %v1803 = vld [vmem:[%s3 + $0xf0] sm:$0xff]
  %v1804 = vld [vmem:[%s3 + $0xf8] sm:$0xff]
  %v1805 = vld [vmem:[%s3 + $0x100] sm:$0xff]
  %v1806 = vld [vmem:[%s3 + $0x108] sm:$0xff]
  %v1807 = vld [vmem:[%s3 + $0x110] sm:$0xff]
  %v1808 = vld [vmem:[%s3 + $0x118] sm:$0xff]
  %v1809 = vld [vmem:[%s3 + $0x120] sm:$0xff]
  %v1810 = vld [vmem:[%s3 + $0x128] sm:$0xff]
  %v1811 = vld [vmem:[%s3 + $0x130] sm:$0xff]
  %v1812 = vld [vmem:[%s3 + $0x138] sm:$0xff]
  %v1813 = vld [vmem:[%s3 + $0x140] sm:$0xff]
  %v1814 = vld [vmem:[%s3 + $0x148] sm:$0xff]
  %v1815 = vld [vmem:[%s3 + $0x150] sm:$0xff]
  %v1816 = vld [vmem:[%s3 + $0x158] sm:$0xff]
  %v1817 = vld [vmem:[%s3 + $0x160] sm:$0xff]
  %v1818 = vld [vmem:[%s3 + $0x168] sm:$0xff]
  %v1819 = vld [vmem:[%s3 + $0x170] sm:$0xff]
  %v1820 = vld [vmem:[%s3 + $0x178] sm:$0xff]
  %v1821 = vld [vmem:[%s3 + $0x180] sm:$0xff]
  %v1822 = vld [vmem:[%s3 + $0x188] sm:$0xff]
  %v1823 = vld [vmem:[%s3 + $0x190] sm:$0xff]
  %v1824 = vld [vmem:[%s3 + $0x198] sm:$0xff]
  %v1825 = vld [vmem:[%s3 + $0x1a0] sm:$0xff]
  %v1826 = vld [vmem:[%s3 + $0x1a8] sm:$0xff]
  %v1827 = vld [vmem:[%s3 + $0x1b0] sm:$0xff]
  %v1828 = vld [vmem:[%s3 + $0x1b8] sm:$0xff]
  %v1829 = vld [vmem:[%s3 + $0x1c0] sm:$0xff]
  %v1830 = vld [vmem:[%s3 + $0x1c8] sm:$0xff]
  %v1831 = vld [vmem:[%s3 + $0x1d0] sm:$0xff]
  %v1832 = vld [vmem:[%s3 + $0x1d8] sm:$0xff]
  %v1833 = vld [vmem:[%s3 + $0x1e0] sm:$0xff]
  %v1834 = vld [vmem:[%s3 + $0x1e8] sm:$0xff]
  %v1835 = vld [vmem:[%s3 + $0x1f0] sm:$0xff]
  %v1836 = vld [vmem:[%s3 + $0x1f8] sm:$0xff]
  %v1837 = vld [vmem:[%s3 + $0x200] sm:$0xff]
  %v1838 = vld [vmem:[%s3 + $0x208] sm:$0xff]
  %v1839 = vld [vmem:[%s3 + $0x210] sm:$0xff]
  %v1840 = vld [vmem:[%s3 + $0x218] sm:$0xff]
  %v1841 = vld [vmem:[%s3 + $0x220] sm:$0xff]
  %v1842 = vld [vmem:[%s3 + $0x228] sm:$0xff]
  %v1843 = vld [vmem:[%s3 + $0x230] sm:$0xff]
  %v1844 = vld [vmem:[%s3 + $0x238] sm:$0xff]
  %v1845 = vld [vmem:[%s3 + $0x240] sm:$0xff]
  %v1846 = vld [vmem:[%s3 + $0x248] sm:$0xff]
  %v1847 = vld [vmem:[%s3 + $0x250] sm:$0xff]
  %v1848 = vld [vmem:[%s3 + $0x258] sm:$0xff]
  %v1849 = vld [vmem:[%s3 + $0x260] sm:$0xff]
  %v1850 = vld [vmem:[%s3 + $0x268] sm:$0xff]
  %v1851 = vld [vmem:[%s3 + $0x270] sm:$0xff]
  %v1852 = vld [vmem:[%s3 + $0x278] sm:$0xff]
  %v1853 = vld [vmem:[%s3 + $0x280] sm:$0xff]
  %v1854 = vld [vmem:[%s3 + $0x288] sm:$0xff]
  %v1855 = vld [vmem:[%s3 + $0x290] sm:$0xff]
  %v1856 = vld [vmem:[%s3 + $0x298] sm:$0xff]
  %v1857 = vld [vmem:[%s3 + $0x2a0] sm:$0xff]
  %v1858 = vld [vmem:[%s3 + $0x2a8] sm:$0xff]
  %v1859 = vld [vmem:[%s3 + $0x2b0] sm:$0xff]
  %v1860 = vld [vmem:[%s3 + $0x2b8] sm:$0xff]
  %v1861 = vld [vmem:[%s3 + $0x2c0] sm:$0xff]
  %v1862 = vld [vmem:[%s3 + $0x2c8] sm:$0xff]
  %v1863 = vld [vmem:[%s3 + $0x2d0] sm:$0xff]
  %v1864 = vld [vmem:[%s3 + $0x2d8] sm:$0xff]
  %v1865 = vld [vmem:[%s3 + $0x2e0] sm:$0xff]
  %v1866 = vld [vmem:[%s3 + $0x2e8] sm:$0xff]
  %v1867 = vld [vmem:[%s3 + $0x2f0] sm:$0xff]
  %v1868 = vld [vmem:[%s3 + $0x2f8] sm:$0xff]
  %v1869 = vld [vmem:[%s3 + $0x300] sm:$0xff]
  %v1870 = vld [vmem:[%s3 + $0x308] sm:$0xff]
  %v1871 = vld [vmem:[%s3 + $0x310] sm:$0xff]
  %v1872 = vld [vmem:[%s3 + $0x318] sm:$0xff]
  %v1873 = vld [vmem:[%s3 + $0x320] sm:$0xff]
  %v1874 = vld [vmem:[%s3 + $0x328] sm:$0xff]
  %v1875 = vld [vmem:[%s3 + $0x330] sm:$0xff]
  %v1876 = vld [vmem:[%s3 + $0x338] sm:$0xff]
  %v1877 = vld [vmem:[%s3 + $0x340] sm:$0xff]
  %v1878 = vld [vmem:[%s3 + $0x348] sm:$0xff]
  %v1879 = vld [vmem:[%s3 + $0x350] sm:$0xff]
  %v1880 = vld [vmem:[%s3 + $0x358] sm:$0xff]
  %v1881 = vld [vmem:[%s3 + $0x360] sm:$0xff]
  %v1882 = vld [vmem:[%s3 + $0x368] sm:$0xff]
  %v1883 = vld [vmem:[%s3 + $0x370] sm:$0xff]
  %v1884 = vld [vmem:[%s3 + $0x378] sm:$0xff]
  %v1885 = vld [vmem:[%s3 + $0x380] sm:$0xff]
  %v1886 = vld [vmem:[%s3 + $0x388] sm:$0xff]
  %v1887 = vld [vmem:[%s3 + $0x390] sm:$0xff]
  %v1888 = vld [vmem:[%s3 + $0x398] sm:$0xff]
  %v1889 = vld [vmem:[%s3 + $0x3a0] sm:$0xff]
  %v1890 = vld [vmem:[%s3 + $0x3a8] sm:$0xff]
  %v1891 = vld [vmem:[%s3 + $0x3b0] sm:$0xff]
  %v1892 = vld [vmem:[%s3 + $0x3b8] sm:$0xff]
  %v1893 = vld [vmem:[%s3 + $0x3c0] sm:$0xff]
  %v1894 = vld [vmem:[%s3 + $0x3c8] sm:$0xff]
  %v1895 = vld [vmem:[%s3 + $0x3d0] sm:$0xff]
  %v1896 = vld [vmem:[%s3 + $0x3d8] sm:$0xff]
  %v1897 = vld [vmem:[%s3 + $0x3e0] sm:$0xff]
  %v1898 = vld [vmem:[%s3 + $0x3e8] sm:$0xff]
  %v1899 = vld [vmem:[%s3 + $0x3f0] sm:$0xff]
  %v1900 = vld [vmem:[%s3 + $0x3f8] sm:$0xff]
  %v1901 = vld [vmem:[%s4] sm:$0xf]
  %v1903 = vlaneseq
  %v1904 = vshrl.u32 %v1903, 7
  %v1905 = vsub.s32 0, %v1904
  %v1906 = vrot.slane %v1901, %v1905
  %v1907 = vlaneseq
  %v1908 = vshrl.u32 %v1907, 7
  %v1909 = vsub.s32 1, %v1908
  %v1910 = vrot.slane %v1901, %v1909
  %v1911 = vlaneseq
  %v1912 = vshrl.u32 %v1911, 7
  %v1913 = vsub.s32 2, %v1912
  %v1914 = vrot.slane %v1901, %v1913
  %v1915 = vlaneseq
  %v1916 = vshrl.u32 %v1915, 7
  %v1917 = vsub.s32 3, %v1916
  %v1918 = vrot.slane %v1901, %v1917
  %v2051 = vunpack.c.l.b16 %v1773
  %v2052 = vunpack.c.h.b16 %v1773
  %v2053 = vunpack.c.l.b16 %v1774
  %v2054 = vunpack.c.h.b16 %v1774
  %v2055 = vunpack.c.l.b16 %v1775
  %v2056 = vunpack.c.h.b16 %v1775
  %v2057 = vunpack.c.l.b16 %v1776
  %v2058 = vunpack.c.h.b16 %v1776
  %v2059 = vunpack.c.l.b16 %v1777
  %v2060 = vunpack.c.h.b16 %v1777
  %v2061 = vunpack.c.l.b16 %v1778
  %v2062 = vunpack.c.h.b16 %v1778
  %v2063 = vunpack.c.l.b16 %v1779
  %v2064 = vunpack.c.h.b16 %v1779
  %v2065 = vunpack.c.l.b16 %v1780
  %v2066 = vunpack.c.h.b16 %v1780
  %v2067 = vunpack.c.l.b16 %v1781
  %v2068 = vunpack.c.h.b16 %v1781
  %v2069 = vunpack.c.l.b16 %v1782
  %v2070 = vunpack.c.h.b16 %v1782
  %v2071 = vunpack.c.l.b16 %v1783
  %v2072 = vunpack.c.h.b16 %v1783
  %v2073 = vunpack.c.l.b16 %v1784
  %v2074 = vunpack.c.h.b16 %v1784
  %v2075 = vunpack.c.l.b16 %v1785
  %v2076 = vunpack.c.h.b16 %v1785
  %v2077 = vunpack.c.l.b16 %v1786
  %v2078 = vunpack.c.h.b16 %v1786
  %v2079 = vunpack.c.l.b16 %v1787
  %v2080 = vunpack.c.h.b16 %v1787
  %v2081 = vunpack.c.l.b16 %v1788
  %v2082 = vunpack.c.h.b16 %v1788
  %v2083 = vunpack.c.l.b16 %v1789
  %v2084 = vunpack.c.h.b16 %v1789
  %v2085 = vunpack.c.l.b16 %v1790
  %v2086 = vunpack.c.h.b16 %v1790
  %v2087 = vunpack.c.l.b16 %v1791
  %v2088 = vunpack.c.h.b16 %v1791
  %v2089 = vunpack.c.l.b16 %v1792
  %v2090 = vunpack.c.h.b16 %v1792
  %v2091 = vunpack.c.l.b16 %v1793
  %v2092 = vunpack.c.h.b16 %v1793
  %v2093 = vunpack.c.l.b16 %v1794
  %v2094 = vunpack.c.h.b16 %v1794
  %v2095 = vunpack.c.l.b16 %v1795
  %v2096 = vunpack.c.h.b16 %v1795
  %v2097 = vunpack.c.l.b16 %v1796
  %v2098 = vunpack.c.h.b16 %v1796
  %v2099 = vunpack.c.l.b16 %v1797
  %v2100 = vunpack.c.h.b16 %v1797
  %v2101 = vunpack.c.l.b16 %v1798
  %v2102 = vunpack.c.h.b16 %v1798
  %v2103 = vunpack.c.l.b16 %v1799
  %v2104 = vunpack.c.h.b16 %v1799
  %v2105 = vunpack.c.l.b16 %v1800
  %v2106 = vunpack.c.h.b16 %v1800
  %v2107 = vunpack.c.l.b16 %v1801
  %v2108 = vunpack.c.h.b16 %v1801
  %v2109 = vunpack.c.l.b16 %v1802
  %v2110 = vunpack.c.h.b16 %v1802
  %v2111 = vunpack.c.l.b16 %v1803
  %v2112 = vunpack.c.h.b16 %v1803
  %v2113 = vunpack.c.l.b16 %v1804
  %v2114 = vunpack.c.h.b16 %v1804
  %v2115 = vunpack.c.l.b16 %v1805
  %v2116 = vunpack.c.h.b16 %v1805
  %v2117 = vunpack.c.l.b16 %v1806
  %v2118 = vunpack.c.h.b16 %v1806
  %v2119 = vunpack.c.l.b16 %v1807
  %v2120 = vunpack.c.h.b16 %v1807
  %v2121 = vunpack.c.l.b16 %v1808
  %v2122 = vunpack.c.h.b16 %v1808
  %v2123 = vunpack.c.l.b16 %v1809
  %v2124 = vunpack.c.h.b16 %v1809
  %v2125 = vunpack.c.l.b16 %v1810
  %v2126 = vunpack.c.h.b16 %v1810
  %v2127 = vunpack.c.l.b16 %v1811
  %v2128 = vunpack.c.h.b16 %v1811
  %v2129 = vunpack.c.l.b16 %v1812
  %v2130 = vunpack.c.h.b16 %v1812
  %v2131 = vunpack.c.l.b16 %v1813
  %v2132 = vunpack.c.h.b16 %v1813
  %v2133 = vunpack.c.l.b16 %v1814
  %v2134 = vunpack.c.h.b16 %v1814
  %v2135 = vunpack.c.l.b16 %v1815
  %v2136 = vunpack.c.h.b16 %v1815
  %v2137 = vunpack.c.l.b16 %v1816
  %v2138 = vunpack.c.h.b16 %v1816
  %v2139 = vunpack.c.l.b16 %v1817
  %v2140 = vunpack.c.h.b16 %v1817
  %v2141 = vunpack.c.l.b16 %v1818
  %v2142 = vunpack.c.h.b16 %v1818
  %v2143 = vunpack.c.l.b16 %v1819
  %v2144 = vunpack.c.h.b16 %v1819
  %v2145 = vunpack.c.l.b16 %v1820
  %v2146 = vunpack.c.h.b16 %v1820
  %v2147 = vunpack.c.l.b16 %v1821
  %v2148 = vunpack.c.h.b16 %v1821
  %v2149 = vunpack.c.l.b16 %v1822
  %v2150 = vunpack.c.h.b16 %v1822
  %v2151 = vunpack.c.l.b16 %v1823
  %v2152 = vunpack.c.h.b16 %v1823
  %v2153 = vunpack.c.l.b16 %v1824
  %v2154 = vunpack.c.h.b16 %v1824
  %v2155 = vunpack.c.l.b16 %v1825
  %v2156 = vunpack.c.h.b16 %v1825
  %v2157 = vunpack.c.l.b16 %v1826
  %v2158 = vunpack.c.h.b16 %v1826
  %v2159 = vunpack.c.l.b16 %v1827
  %v2160 = vunpack.c.h.b16 %v1827
  %v2161 = vunpack.c.l.b16 %v1828
  %v2162 = vunpack.c.h.b16 %v1828
  %v2163 = vunpack.c.l.b16 %v1829
  %v2164 = vunpack.c.h.b16 %v1829
  %v2165 = vunpack.c.l.b16 %v1830
  %v2166 = vunpack.c.h.b16 %v1830
  %v2167 = vunpack.c.l.b16 %v1831
  %v2168 = vunpack.c.h.b16 %v1831
  %v2169 = vunpack.c.l.b16 %v1832
  %v2170 = vunpack.c.h.b16 %v1832
  %v2171 = vunpack.c.l.b16 %v1833
  %v2172 = vunpack.c.h.b16 %v1833
  %v2173 = vunpack.c.l.b16 %v1834
  %v2174 = vunpack.c.h.b16 %v1834
  %v2175 = vunpack.c.l.b16 %v1835
  %v2176 = vunpack.c.h.b16 %v1835
  %v2177 = vunpack.c.l.b16 %v1836
  %v2178 = vunpack.c.h.b16 %v1836
  %v2179 = vunpack.c.l.b16 %v1837
  %v2180 = vunpack.c.h.b16 %v1837
  %v2181 = vunpack.c.l.b16 %v1838
  %v2182 = vunpack.c.h.b16 %v1838
  %v2183 = vunpack.c.l.b16 %v1839
  %v2184 = vunpack.c.h.b16 %v1839
  %v2185 = vunpack.c.l.b16 %v1840
  %v2186 = vunpack.c.h.b16 %v1840
  %v2187 = vunpack.c.l.b16 %v1841
  %v2188 = vunpack.c.h.b16 %v1841
  %v2189 = vunpack.c.l.b16 %v1842
  %v2190 = vunpack.c.h.b16 %v1842
  %v2191 = vunpack.c.l.b16 %v1843
  %v2192 = vunpack.c.h.b16 %v1843
  %v2193 = vunpack.c.l.b16 %v1844
  %v2194 = vunpack.c.h.b16 %v1844
  %v2195 = vunpack.c.l.b16 %v1845
  %v2196 = vunpack.c.h.b16 %v1845
  %v2197 = vunpack.c.l.b16 %v1846
  %v2198 = vunpack.c.h.b16 %v1846
  %v2199 = vunpack.c.l.b16 %v1847
  %v2200 = vunpack.c.h.b16 %v1847
  %v2201 = vunpack.c.l.b16 %v1848
  %v2202 = vunpack.c.h.b16 %v1848
  %v2203 = vunpack.c.l.b16 %v1849
  %v2204 = vunpack.c.h.b16 %v1849
  %v2205 = vunpack.c.l.b16 %v1850
  %v2206 = vunpack.c.h.b16 %v1850
  %v2207 = vunpack.c.l.b16 %v1851
  %v2208 = vunpack.c.h.b16 %v1851
  %v2209 = vunpack.c.l.b16 %v1852
  %v2210 = vunpack.c.h.b16 %v1852
  %v2211 = vunpack.c.l.b16 %v1853
  %v2212 = vunpack.c.h.b16 %v1853
  %v2213 = vunpack.c.l.b16 %v1854
  %v2214 = vunpack.c.h.b16 %v1854
  %v2215 = vunpack.c.l.b16 %v1855
  %v2216 = vunpack.c.h.b16 %v1855
  %v2217 = vunpack.c.l.b16 %v1856
  %v2218 = vunpack.c.h.b16 %v1856
  %v2219 = vunpack.c.l.b16 %v1857
  %v2220 = vunpack.c.h.b16 %v1857
  %v2221 = vunpack.c.l.b16 %v1858
  %v2222 = vunpack.c.h.b16 %v1858
  %v2223 = vunpack.c.l.b16 %v1859
  %v2224 = vunpack.c.h.b16 %v1859
  %v2225 = vunpack.c.l.b16 %v1860
  %v2226 = vunpack.c.h.b16 %v1860
  %v2227 = vunpack.c.l.b16 %v1861
  %v2228 = vunpack.c.h.b16 %v1861
  %v2229 = vunpack.c.l.b16 %v1862
  %v2230 = vunpack.c.h.b16 %v1862
  %v2231 = vunpack.c.l.b16 %v1863
  %v2232 = vunpack.c.h.b16 %v1863
  %v2233 = vunpack.c.l.b16 %v1864
  %v2234 = vunpack.c.h.b16 %v1864
  %v2235 = vunpack.c.l.b16 %v1865
  %v2236 = vunpack.c.h.b16 %v1865
  %v2237 = vunpack.c.l.b16 %v1866
  %v2238 = vunpack.c.h.b16 %v1866
  %v2239 = vunpack.c.l.b16 %v1867
  %v2240 = vunpack.c.h.b16 %v1867
  %v2241 = vunpack.c.l.b16 %v1868
  %v2242 = vunpack.c.h.b16 %v1868
  %v2243 = vunpack.c.l.b16 %v1869
  %v2244 = vunpack.c.h.b16 %v1869
  %v2245 = vunpack.c.l.b16 %v1870
  %v2246 = vunpack.c.h.b16 %v1870
  %v2247 = vunpack.c.l.b16 %v1871
  %v2248 = vunpack.c.h.b16 %v1871
  %v2249 = vunpack.c.l.b16 %v1872
  %v2250 = vunpack.c.h.b16 %v1872
  %v2251 = vunpack.c.l.b16 %v1873
  %v2252 = vunpack.c.h.b16 %v1873
  %v2253 = vunpack.c.l.b16 %v1874
  %v2254 = vunpack.c.h.b16 %v1874
  %v2255 = vunpack.c.l.b16 %v1875
  %v2256 = vunpack.c.h.b16 %v1875
  %v2257 = vunpack.c.l.b16 %v1876
  %v2258 = vunpack.c.h.b16 %v1876
  %v2259 = vunpack.c.l.b16 %v1877
  %v2260 = vunpack.c.h.b16 %v1877
  %v2261 = vunpack.c.l.b16 %v1878
  %v2262 = vunpack.c.h.b16 %v1878
  %v2263 = vunpack.c.l.b16 %v1879
  %v2264 = vunpack.c.h.b16 %v1879
  %v2265 = vunpack.c.l.b16 %v1880
  %v2266 = vunpack.c.h.b16 %v1880
  %v2267 = vunpack.c.l.b16 %v1881
  %v2268 = vunpack.c.h.b16 %v1881
  %v2269 = vunpack.c.l.b16 %v1882
  %v2270 = vunpack.c.h.b16 %v1882
  %v2271 = vunpack.c.l.b16 %v1883
  %v2272 = vunpack.c.h.b16 %v1883
  %v2273 = vunpack.c.l.b16 %v1884
  %v2274 = vunpack.c.h.b16 %v1884
  %v2275 = vunpack.c.l.b16 %v1885
  %v2276 = vunpack.c.h.b16 %v1885
  %v2277 = vunpack.c.l.b16 %v1886
  %v2278 = vunpack.c.h.b16 %v1886
  %v2279 = vunpack.c.l.b16 %v1887
  %v2280 = vunpack.c.h.b16 %v1887
  %v2281 = vunpack.c.l.b16 %v1888
  %v2282 = vunpack.c.h.b16 %v1888
  %v2283 = vunpack.c.l.b16 %v1889
  %v2284 = vunpack.c.h.b16 %v1889
  %v2285 = vunpack.c.l.b16 %v1890
  %v2286 = vunpack.c.h.b16 %v1890
  %v2287 = vunpack.c.l.b16 %v1891
  %v2288 = vunpack.c.h.b16 %v1891
  %v2289 = vunpack.c.l.b16 %v1892
  %v2290 = vunpack.c.h.b16 %v1892
  %v2291 = vunpack.c.l.b16 %v1893
  %v2292 = vunpack.c.h.b16 %v1893
  %v2293 = vunpack.c.l.b16 %v1894
  %v2294 = vunpack.c.h.b16 %v1894
  %v2295 = vunpack.c.l.b16 %v1895
  %v2296 = vunpack.c.h.b16 %v1895
  %v2297 = vunpack.c.l.b16 %v1896
  %v2298 = vunpack.c.h.b16 %v1896
  %v2299 = vunpack.c.l.b16 %v1897
  %v2300 = vunpack.c.h.b16 %v1897
  %v2301 = vunpack.c.l.b16 %v1898
  %v2302 = vunpack.c.h.b16 %v1898
  %v2303 = vunpack.c.l.b16 %v1899
  %v2304 = vunpack.c.h.b16 %v1899
  %v2305 = vunpack.c.l.b16 %v1900
  %v2306 = vunpack.c.h.b16 %v1900
  %v2307 = vpack.c.b16 %v2055, %v2051
  %v2308 = vpack.c.b16 %v2056, %v2052
  %v2309 = vpack.c.b16 %v2057, %v2053
  %v2310 = vpack.c.b16 %v2058, %v2054
  %v2311 = vpack.c.b16 %v2063, %v2059
  %v2312 = vpack.c.b16 %v2064, %v2060
  %v2313 = vpack.c.b16 %v2065, %v2061
  %v2314 = vpack.c.b16 %v2066, %v2062
  %v2315 = vpack.c.b16 %v2071, %v2067
  %v2316 = vpack.c.b16 %v2072, %v2068
  %v2317 = vpack.c.b16 %v2073, %v2069
  %v2318 = vpack.c.b16 %v2074, %v2070
  %v2319 = vpack.c.b16 %v2079, %v2075
  %v2320 = vpack.c.b16 %v2080, %v2076
  %v2321 = vpack.c.b16 %v2081, %v2077
  %v2322 = vpack.c.b16 %v2082, %v2078
  %v2323 = vpack.c.b16 %v2087, %v2083
  %v2324 = vpack.c.b16 %v2088, %v2084
  %v2325 = vpack.c.b16 %v2089, %v2085
  %v2326 = vpack.c.b16 %v2090, %v2086
  %v2327 = vpack.c.b16 %v2095, %v2091
  %v2328 = vpack.c.b16 %v2096, %v2092
  %v2329 = vpack.c.b16 %v2097, %v2093
  %v2330 = vpack.c.b16 %v2098, %v2094
  %v2331 = vpack.c.b16 %v2103, %v2099
  %v2332 = vpack.c.b16 %v2104, %v2100
  %v2333 = vpack.c.b16 %v2105, %v2101
  %v2334 = vpack.c.b16 %v2106, %v2102
  %v2335 = vpack.c.b16 %v2111, %v2107
  %v2336 = vpack.c.b16 %v2112, %v2108
  %v2337 = vpack.c.b16 %v2113, %v2109
  %v2338 = vpack.c.b16 %v2114, %v2110
  %v2339 = vpack.c.b16 %v2119, %v2115
  %v2340 = vpack.c.b16 %v2120, %v2116
  %v2341 = vpack.c.b16 %v2121, %v2117
  %v2342 = vpack.c.b16 %v2122, %v2118
  %v2343 = vpack.c.b16 %v2127, %v2123
  %v2344 = vpack.c.b16 %v2128, %v2124
  %v2345 = vpack.c.b16 %v2129, %v2125
  %v2346 = vpack.c.b16 %v2130, %v2126
  %v2347 = vpack.c.b16 %v2135, %v2131
  %v2348 = vpack.c.b16 %v2136, %v2132
  %v2349 = vpack.c.b16 %v2137, %v2133
  %v2350 = vpack.c.b16 %v2138, %v2134
  %v2351 = vpack.c.b16 %v2143, %v2139
  %v2352 = vpack.c.b16 %v2144, %v2140
  %v2353 = vpack.c.b16 %v2145, %v2141
  %v2354 = vpack.c.b16 %v2146, %v2142
  %v2355 = vpack.c.b16 %v2151, %v2147
  %v2356 = vpack.c.b16 %v2152, %v2148
  %v2357 = vpack.c.b16 %v2153, %v2149
  %v2358 = vpack.c.b16 %v2154, %v2150
  %v2359 = vpack.c.b16 %v2159, %v2155
  %v2360 = vpack.c.b16 %v2160, %v2156
  %v2361 = vpack.c.b16 %v2161, %v2157
  %v2362 = vpack.c.b16 %v2162, %v2158
  %v2363 = vpack.c.b16 %v2167, %v2163
  %v2364 = vpack.c.b16 %v2168, %v2164
  %v2365 = vpack.c.b16 %v2169, %v2165
  %v2366 = vpack.c.b16 %v2170, %v2166
  %v2367 = vpack.c.b16 %v2175, %v2171
  %v2368 = vpack.c.b16 %v2176, %v2172
  %v2369 = vpack.c.b16 %v2177, %v2173
  %v2370 = vpack.c.b16 %v2178, %v2174
  %v2371 = vpack.c.b16 %v2183, %v2179
  %v2372 = vpack.c.b16 %v2184, %v2180
  %v2373 = vpack.c.b16 %v2185, %v2181
  %v2374 = vpack.c.b16 %v2186, %v2182
  %v2375 = vpack.c.b16 %v2191, %v2187
  %v2376 = vpack.c.b16 %v2192, %v2188
  %v2377 = vpack.c.b16 %v2193, %v2189
  %v2378 = vpack.c.b16 %v2194, %v2190
  %v2379 = vpack.c.b16 %v2199, %v2195
  %v2380 = vpack.c.b16 %v2200, %v2196
  %v2381 = vpack.c.b16 %v2201, %v2197
  %v2382 = vpack.c.b16 %v2202, %v2198
  %v2383 = vpack.c.b16 %v2207, %v2203
  %v2384 = vpack.c.b16 %v2208, %v2204
  %v2385 = vpack.c.b16 %v2209, %v2205
  %v2386 = vpack.c.b16 %v2210, %v2206
  %v2387 = vpack.c.b16 %v2215, %v2211
  %v2388 = vpack.c.b16 %v2216, %v2212
  %v2389 = vpack.c.b16 %v2217, %v2213
  %v2390 = vpack.c.b16 %v2218, %v2214
  %v2391 = vpack.c.b16 %v2223, %v2219
  %v2392 = vpack.c.b16 %v2224, %v2220
  %v2393 = vpack.c.b16 %v2225, %v2221
  %v2394 = vpack.c.b16 %v2226, %v2222
  %v2395 = vpack.c.b16 %v2231, %v2227
  %v2396 = vpack.c.b16 %v2232, %v2228
  %v2397 = vpack.c.b16 %v2233, %v2229
  %v2398 = vpack.c.b16 %v2234, %v2230
  %v2399 = vpack.c.b16 %v2239, %v2235
  %v2400 = vpack.c.b16 %v2240, %v2236
  %v2401 = vpack.c.b16 %v2241, %v2237
  %v2402 = vpack.c.b16 %v2242, %v2238
  %v2403 = vpack.c.b16 %v2247, %v2243
  %v2404 = vpack.c.b16 %v2248, %v2244
  %v2405 = vpack.c.b16 %v2249, %v2245
  %v2406 = vpack.c.b16 %v2250, %v2246
  %v2407 = vpack.c.b16 %v2255, %v2251
  %v2408 = vpack.c.b16 %v2256, %v2252
  %v2409 = vpack.c.b16 %v2257, %v2253
  %v2410 = vpack.c.b16 %v2258, %v2254
  %v2411 = vpack.c.b16 %v2263, %v2259
  %v2412 = vpack.c.b16 %v2264, %v2260
  %v2413 = vpack.c.b16 %v2265, %v2261
  %v2414 = vpack.c.b16 %v2266, %v2262
  %v2415 = vpack.c.b16 %v2271, %v2267
  %v2416 = vpack.c.b16 %v2272, %v2268
  %v2417 = vpack.c.b16 %v2273, %v2269
  %v2418 = vpack.c.b16 %v2274, %v2270
  %v2419 = vpack.c.b16 %v2279, %v2275
  %v2420 = vpack.c.b16 %v2280, %v2276
  %v2421 = vpack.c.b16 %v2281, %v2277
  %v2422 = vpack.c.b16 %v2282, %v2278
  %v2423 = vpack.c.b16 %v2287, %v2283
  %v2424 = vpack.c.b16 %v2288, %v2284
  %v2425 = vpack.c.b16 %v2289, %v2285
  %v2426 = vpack.c.b16 %v2290, %v2286
  %v2427 = vpack.c.b16 %v2295, %v2291
  %v2428 = vpack.c.b16 %v2296, %v2292
  %v2429 = vpack.c.b16 %v2297, %v2293
  %v2430 = vpack.c.b16 %v2298, %v2294
  %v2431 = vpack.c.b16 %v2303, %v2299
  %v2432 = vpack.c.b16 %v2304, %v2300
  %v2433 = vpack.c.b16 %v2305, %v2301
  %v2434 = vpack.c.b16 %v2306, %v2302
  %2563 = vmatprep.subr.bf16.mxu0 %v2336
  %2564 = vmatpush1.bf16.msra.mxu0 %v2335
  %2565 = vmatprep.subr.bf16.mxu0 %v2332
  %2566 = vmatpush1.bf16.msra.mxu0 %v2331
  %2567 = vmatprep.subr.bf16.mxu0 %v2328
  %2568 = vmatpush1.bf16.msra.mxu0 %v2327
  %2569 = vmatprep.subr.bf16.mxu0 %v2324
  %2570 = vmatpush1.bf16.msra.mxu0 %v2323
  %2571 = vmatprep.subr.bf16.mxu0 %v2320
  %2572 = vmatpush1.bf16.msra.mxu0 %v2319
  %2573 = vmatprep.subr.bf16.mxu0 %v2316
  %2574 = vmatpush1.bf16.msra.mxu0 %v2315
  %2575 = vmatprep.subr.bf16.mxu0 %v2312
  %2576 = vmatpush1.bf16.msra.mxu0 %v2311
  %2577 = vmatprep.subr.bf16.mxu0 %v2308
  %2578 = vmatpush1.bf16.msra.mxu0 %v2307
  %2579 = vmatprep.subr.bf16.mxu0 %v2368
  %2580 = vmatpush2.bf16.msra.mxu0 %v2367
  %2581 = vmatprep.subr.bf16.mxu0 %v2364
  %2582 = vmatpush2.bf16.msra.mxu0 %v2363
  %2583 = vmatprep.subr.bf16.mxu0 %v2360
  %2584 = vmatpush2.bf16.msra.mxu0 %v2359
  %2585 = vmatprep.subr.bf16.mxu0 %v2356
  %2586 = vmatpush2.bf16.msra.mxu0 %v2355
  %2587 = vmatprep.subr.bf16.mxu0 %v2352
  %2588 = vmatpush2.bf16.msra.mxu0 %v2351
  %2589 = vmatprep.subr.bf16.mxu0 %v2348
  %2590 = vmatpush2.bf16.msra.mxu0 %v2347
  %2591 = vmatprep.subr.bf16.mxu0 %v2344
  %2592 = vmatpush2.bf16.msra.mxu0 %v2343
  %2593 = vmatprep.subr.bf16.mxu0 %v2340
  %2594 = vmatpush2.bf16.msra.mxu0 %v2339
  %2595 = vmatprep.mubr.bf16.mxu0 %v1770
  %2596 = vmatmul.mubr.bf16.gmra.mxu0 %v1769
  %v2597 = vpop.f32.mrf.mxu0
  %v2598 = vadd.f32 %v1906, %v2597
  %v2599 = vpop.f32.mrf.mxu0
  %v2600 = vadd.f32 %v1910, %v2599
  %v2601 = vpop.f32.mrf.mxu0
  %v2602 = vpop.f32.mrf.mxu0
  %2603 = vdwg.mxu0
  %2604 = vmatprep.subr.bf16.mxu0 %v2400
  %2605 = vmatpush1.bf16.msra.mxu0 %v2399
  %2606 = vmatprep.subr.bf16.mxu0 %v2396
  %2607 = vmatpush1.bf16.msra.mxu0 %v2395
  %2608 = vmatprep.subr.bf16.mxu0 %v2392
  %2609 = vmatpush1.bf16.msra.mxu0 %v2391
  %2610 = vmatprep.subr.bf16.mxu0 %v2388
  %2611 = vmatpush1.bf16.msra.mxu0 %v2387
  %2612 = vmatprep.subr.bf16.mxu0 %v2384
  %2613 = vmatpush1.bf16.msra.mxu0 %v2383
  %2614 = vmatprep.subr.bf16.mxu0 %v2380
  %2615 = vmatpush1.bf16.msra.mxu0 %v2379
  %2616 = vmatprep.subr.bf16.mxu0 %v2376
  %2617 = vmatpush1.bf16.msra.mxu0 %v2375
  %2618 = vmatprep.subr.bf16.mxu0 %v2372
  %2619 = vmatpush1.bf16.msra.mxu0 %v2371
  %2620 = vmatprep.subr.bf16.mxu0 %v2432
  %2621 = vmatpush2.bf16.msra.mxu0 %v2431
  %2622 = vmatprep.subr.bf16.mxu0 %v2428
  %2623 = vmatpush2.bf16.msra.mxu0 %v2427
  %2624 = vmatprep.subr.bf16.mxu0 %v2424
  %2625 = vmatpush2.bf16.msra.mxu0 %v2423
  %2626 = vmatprep.subr.bf16.mxu0 %v2420
  %2627 = vmatpush2.bf16.msra.mxu0 %v2419
  %2628 = vmatprep.subr.bf16.mxu0 %v2416
  %2629 = vmatpush2.bf16.msra.mxu0 %v2415
  %2630 = vmatprep.subr.bf16.mxu0 %v2412
  %2631 = vmatpush2.bf16.msra.mxu0 %v2411
  %2632 = vmatprep.subr.bf16.mxu0 %v2408
  %2633 = vmatpush2.bf16.msra.mxu0 %v2407
  %2634 = vmatprep.subr.bf16.mxu0 %v2404
  %2635 = vmatpush2.bf16.msra.mxu0 %v2403
  %2636 = vmatprep.mubr.bf16.mxu0 %v1772
  %2637 = vmatmul.mubr.bf16.gmra.mxu0 %v1771
  %v2638 = vpop.f32.mrf.mxu0
  %v2639 = vadd.f32 %v2598, %v2638
  %v2640 = vpop.f32.mrf.mxu0
  %v2641 = vadd.f32 %v2600, %v2640
  %v2642 = vpop.f32.mrf.mxu0
  %v2643 = vpop.f32.mrf.mxu0
  %2644 = vdwg.mxu0
  %2645 = vmatprep.subr.bf16.mxu0 %v2338
  %2646 = vmatpush1.bf16.msra.mxu0 %v2337
  %2647 = vmatprep.subr.bf16.mxu0 %v2334
  %2648 = vmatpush1.bf16.msra.mxu0 %v2333
  %2649 = vmatprep.subr.bf16.mxu0 %v2330
  %2650 = vmatpush1.bf16.msra.mxu0 %v2329
  %2651 = vmatprep.subr.bf16.mxu0 %v2326
  %2652 = vmatpush1.bf16.msra.mxu0 %v2325
  %2653 = vmatprep.subr.bf16.mxu0 %v2322
  %2654 = vmatpush1.bf16.msra.mxu0 %v2321
  %2655 = vmatprep.subr.bf16.mxu0 %v2318
  %2656 = vmatpush1.bf16.msra.mxu0 %v2317
  %2657 = vmatprep.subr.bf16.mxu0 %v2314
  %2658 = vmatpush1.bf16.msra.mxu0 %v2313
  %2659 = vmatprep.subr.bf16.mxu0 %v2310
  %2660 = vmatpush1.bf16.msra.mxu0 %v2309
  %2661 = vmatprep.subr.bf16.mxu0 %v2370
  %2662 = vmatpush2.bf16.msra.mxu0 %v2369
  %2663 = vmatprep.subr.bf16.mxu0 %v2366
  %2664 = vmatpush2.bf16.msra.mxu0 %v2365
  %2665 = vmatprep.subr.bf16.mxu0 %v2362
  %2666 = vmatpush2.bf16.msra.mxu0 %v2361
  %2667 = vmatprep.subr.bf16.mxu0 %v2358
  %2668 = vmatpush2.bf16.msra.mxu0 %v2357
  %2669 = vmatprep.subr.bf16.mxu0 %v2354
  %2670 = vmatpush2.bf16.msra.mxu0 %v2353
  %2671 = vmatprep.subr.bf16.mxu0 %v2350
  %2672 = vmatpush2.bf16.msra.mxu0 %v2349
  %2673 = vmatprep.subr.bf16.mxu0 %v2346
  %2674 = vmatpush2.bf16.msra.mxu0 %v2345
  %2675 = vmatprep.subr.bf16.mxu0 %v2342
  %2676 = vmatpush2.bf16.msra.mxu0 %v2341
  %2677 = vmatprep.mubr.bf16.mxu0 %v1770
  %2678 = vmatmul.mubr.bf16.gmra.mxu0 %v1769
  %v2679 = vpop.f32.mrf.mxu0
  %v2680 = vadd.f32 %v1914, %v2679
  %v2681 = vpop.f32.mrf.mxu0
  %v2682 = vadd.f32 %v1918, %v2681
  %v2683 = vpop.f32.mrf.mxu0
  %v2684 = vpop.f32.mrf.mxu0
  %2685 = vdwg.mxu0
  %2686 = vmatprep.subr.bf16.mxu0 %v2402
  %2687 = vmatpush1.bf16.msra.mxu0 %v2401
  %2688 = vmatprep.subr.bf16.mxu0 %v2398
  %2689 = vmatpush1.bf16.msra.mxu0 %v2397
  %2690 = vmatprep.subr.bf16.mxu0 %v2394
  %2691 = vmatpush1.bf16.msra.mxu0 %v2393
  %2692 = vmatprep.subr.bf16.mxu0 %v2390
  %2693 = vmatpush1.bf16.msra.mxu0 %v2389
  %2694 = vmatprep.subr.bf16.mxu0 %v2386
  %2695 = vmatpush1.bf16.msra.mxu0 %v2385
  %2696 = vmatprep.subr.bf16.mxu0 %v2382
  %2697 = vmatpush1.bf16.msra.mxu0 %v2381
  %2698 = vmatprep.subr.bf16.mxu0 %v2378
  %2699 = vmatpush1.bf16.msra.mxu0 %v2377
  %2700 = vmatprep.subr.bf16.mxu0 %v2374
  %2701 = vmatpush1.bf16.msra.mxu0 %v2373
  %2702 = vmatprep.subr.bf16.mxu0 %v2434
  %2703 = vmatpush2.bf16.msra.mxu0 %v2433
  %2704 = vmatprep.subr.bf16.mxu0 %v2430
  %2705 = vmatpush2.bf16.msra.mxu0 %v2429
  %2706 = vmatprep.subr.bf16.mxu0 %v2426
  %2707 = vmatpush2.bf16.msra.mxu0 %v2425
  %2708 = vmatprep.subr.bf16.mxu0 %v2422
  %2709 = vmatpush2.bf16.msra.mxu0 %v2421
  %2710 = vmatprep.subr.bf16.mxu0 %v2418
  %2711 = vmatpush2.bf16.msra.mxu0 %v2417
  %2712 = vmatprep.subr.bf16.mxu0 %v2414
  %2713 = vmatpush2.bf16.msra.mxu0 %v2413
  %2714 = vmatprep.subr.bf16.mxu0 %v2410
  %2715 = vmatpush2.bf16.msra.mxu0 %v2409
  %2716 = vmatprep.subr.bf16.mxu0 %v2406
  %2717 = vmatpush2.bf16.msra.mxu0 %v2405
  %2718 = vmatprep.mubr.bf16.mxu0 %v1772
  %2719 = vmatmul.mubr.bf16.gmra.mxu0 %v1771
  %v2720 = vpop.f32.mrf.mxu0
  %v2721 = vadd.f32 %v2680, %v2720
  %v2722 = vpop.f32.mrf.mxu0
  %v2723 = vadd.f32 %v2682, %v2722
  %v2724 = vpop.f32.mrf.mxu0
  %v2725 = vpop.f32.mrf.mxu0
  %2726 = vdwg.mxu0
  %vm2727 = vcmp.ge.f32.partialorder %v2639, 0.0
  %vm2728 = vcmp.ge.f32.partialorder %v2641, 0.0
  %vm2729 = vcmp.ge.f32.partialorder %v2721, 0.0
  %vm2730 = vcmp.ge.f32.partialorder %v2723, 0.0
  %v2731 = vmul.f32 %v2639, 0.2
  %v2732 = vmul.f32 %v2641, 0.2
  %v2733 = vmul.f32 %v2721, 0.2
  %v2734 = vmul.f32 %v2723, 0.2
  %v2735 = vsel %vm2727, %v2639, %v2731
  %v2736 = vsel %vm2728, %v2641, %v2732
  %v2737 = vsel %vm2729, %v2721, %v2733
  %v2738 = vsel %vm2730, %v2723, %v2734
  %v2739 = vpack.c.bf16 %v2735, %v2735
  %v2740 = vpack.c.bf16 %v2736, %v2736
  %v2741 = vpack.c.bf16 %v2737, %v2737
  %v2742 = vpack.c.bf16 %v2738, %v2738
  %v2743 = vld [vmem:[%s5] sm:$0xff]
  %v2744 = vld [vmem:[%s5 + $0x8] sm:$0xff]
  %v2745 = vld [vmem:[%s5 + $0x10] sm:$0xff]
  %v2746 = vld [vmem:[%s5 + $0x18] sm:$0xff]
  %v2747 = vld [vmem:[%s5 + $0x20] sm:$0xff]
  %v2748 = vld [vmem:[%s5 + $0x28] sm:$0xff]
  %v2749 = vld [vmem:[%s5 + $0x30] sm:$0xff]
  %v2750 = vld [vmem:[%s5 + $0x38] sm:$0xff]
  %v2751 = vld [vmem:[%s5 + $0x40] sm:$0xff]
  %v2752 = vld [vmem:[%s5 + $0x48] sm:$0xff]
  %v2753 = vld [vmem:[%s5 + $0x50] sm:$0xff]
  %v2754 = vld [vmem:[%s5 + $0x58] sm:$0xff]
  %v2755 = vld [vmem:[%s5 + $0x60] sm:$0xff]
  %v2756 = vld [vmem:[%s5 + $0x68] sm:$0xff]
  %v2757 = vld [vmem:[%s5 + $0x70] sm:$0xff]
  %v2758 = vld [vmem:[%s5 + $0x78] sm:$0xff]
  %v2759 = vld [vmem:[%s5 + $0x80] sm:$0xff]
  %v2760 = vld [vmem:[%s5 + $0x88] sm:$0xff]
  %v2761 = vld [vmem:[%s5 + $0x90] sm:$0xff]
  %v2762 = vld [vmem:[%s5 + $0x98] sm:$0xff]
  %v2763 = vld [vmem:[%s5 + $0xa0] sm:$0xff]
  %v2764 = vld [vmem:[%s5 + $0xa8] sm:$0xff]
  %v2765 = vld [vmem:[%s5 + $0xb0] sm:$0xff]
  %v2766 = vld [vmem:[%s5 + $0xb8] sm:$0xff]
  %v2767 = vld [vmem:[%s5 + $0xc0] sm:$0xff]
  %v2768 = vld [vmem:[%s5 + $0xc8] sm:$0xff]
  %v2769 = vld [vmem:[%s5 + $0xd0] sm:$0xff]
  %v2770 = vld [vmem:[%s5 + $0xd8] sm:$0xff]
  %v2771 = vld [vmem:[%s5 + $0xe0] sm:$0xff]
  %v2772 = vld [vmem:[%s5 + $0xe8] sm:$0xff]
  %v2773 = vld [vmem:[%s5 + $0xf0] sm:$0xff]
  %v2774 = vld [vmem:[%s5 + $0xf8] sm:$0xff]
  %v2775 = vld [vmem:[%s5 + $0x100] sm:$0xff]
  %v2776 = vld [vmem:[%s5 + $0x108] sm:$0xff]
  %v2777 = vld [vmem:[%s5 + $0x110] sm:$0xff]
  %v2778 = vld [vmem:[%s5 + $0x118] sm:$0xff]
  %v2779 = vld [vmem:[%s5 + $0x120] sm:$0xff]
  %v2780 = vld [vmem:[%s5 + $0x128] sm:$0xff]
  %v2781 = vld [vmem:[%s5 + $0x130] sm:$0xff]
  %v2782 = vld [vmem:[%s5 + $0x138] sm:$0xff]
  %v2783 = vld [vmem:[%s5 + $0x140] sm:$0xff]
  %v2784 = vld [vmem:[%s5 + $0x148] sm:$0xff]
  %v2785 = vld [vmem:[%s5 + $0x150] sm:$0xff]
  %v2786 = vld [vmem:[%s5 + $0x158] sm:$0xff]
  %v2787 = vld [vmem:[%s5 + $0x160] sm:$0xff]
  %v2788 = vld [vmem:[%s5 + $0x168] sm:$0xff]
  %v2789 = vld [vmem:[%s5 + $0x170] sm:$0xff]
  %v2790 = vld [vmem:[%s5 + $0x178] sm:$0xff]
  %v2791 = vld [vmem:[%s5 + $0x180] sm:$0xff]
  %v2792 = vld [vmem:[%s5 + $0x188] sm:$0xff]
  %v2793 = vld [vmem:[%s5 + $0x190] sm:$0xff]
  %v2794 = vld [vmem:[%s5 + $0x198] sm:$0xff]
  %v2795 = vld [vmem:[%s5 + $0x1a0] sm:$0xff]
  %v2796 = vld [vmem:[%s5 + $0x1a8] sm:$0xff]
  %v2797 = vld [vmem:[%s5 + $0x1b0] sm:$0xff]
  %v2798 = vld [vmem:[%s5 + $0x1b8] sm:$0xff]
  %v2799 = vld [vmem:[%s5 + $0x1c0] sm:$0xff]
  %v2800 = vld [vmem:[%s5 + $0x1c8] sm:$0xff]
  %v2801 = vld [vmem:[%s5 + $0x1d0] sm:$0xff]
  %v2802 = vld [vmem:[%s5 + $0x1d8] sm:$0xff]
  %v2803 = vld [vmem:[%s5 + $0x1e0] sm:$0xff]
  %v2804 = vld [vmem:[%s5 + $0x1e8] sm:$0xff]
  %v2805 = vld [vmem:[%s5 + $0x1f0] sm:$0xff]
  %v2806 = vld [vmem:[%s5 + $0x1f8] sm:$0xff]
  %v2807 = vld [vmem:[%s5 + $0x200] sm:$0xff]
  %v2808 = vld [vmem:[%s5 + $0x208] sm:$0xff]
  %v2809 = vld [vmem:[%s5 + $0x210] sm:$0xff]
  %v2810 = vld [vmem:[%s5 + $0x218] sm:$0xff]
  %v2811 = vld [vmem:[%s5 + $0x220] sm:$0xff]
  %v2812 = vld [vmem:[%s5 + $0x228] sm:$0xff]
  %v2813 = vld [vmem:[%s5 + $0x230] sm:$0xff]
  %v2814 = vld [vmem:[%s5 + $0x238] sm:$0xff]
  %v2815 = vld [vmem:[%s5 + $0x240] sm:$0xff]
  %v2816 = vld [vmem:[%s5 + $0x248] sm:$0xff]
  %v2817 = vld [vmem:[%s5 + $0x250] sm:$0xff]
  %v2818 = vld [vmem:[%s5 + $0x258] sm:$0xff]
  %v2819 = vld [vmem:[%s5 + $0x260] sm:$0xff]
  %v2820 = vld [vmem:[%s5 + $0x268] sm:$0xff]
  %v2821 = vld [vmem:[%s5 + $0x270] sm:$0xff]
  %v2822 = vld [vmem:[%s5 + $0x278] sm:$0xff]
  %v2823 = vld [vmem:[%s5 + $0x280] sm:$0xff]
  %v2824 = vld [vmem:[%s5 + $0x288] sm:$0xff]
  %v2825 = vld [vmem:[%s5 + $0x290] sm:$0xff]
  %v2826 = vld [vmem:[%s5 + $0x298] sm:$0xff]
  %v2827 = vld [vmem:[%s5 + $0x2a0] sm:$0xff]
  %v2828 = vld [vmem:[%s5 + $0x2a8] sm:$0xff]
  %v2829 = vld [vmem:[%s5 + $0x2b0] sm:$0xff]
  %v2830 = vld [vmem:[%s5 + $0x2b8] sm:$0xff]
  %v2831 = vld [vmem:[%s5 + $0x2c0] sm:$0xff]
  %v2832 = vld [vmem:[%s5 + $0x2c8] sm:$0xff]
  %v2833 = vld [vmem:[%s5 + $0x2d0] sm:$0xff]
  %v2834 = vld [vmem:[%s5 + $0x2d8] sm:$0xff]
  %v2835 = vld [vmem:[%s5 + $0x2e0] sm:$0xff]
  %v2836 = vld [vmem:[%s5 + $0x2e8] sm:$0xff]
  %v2837 = vld [vmem:[%s5 + $0x2f0] sm:$0xff]
  %v2838 = vld [vmem:[%s5 + $0x2f8] sm:$0xff]
  %v2839 = vld [vmem:[%s5 + $0x300] sm:$0xff]
  %v2840 = vld [vmem:[%s5 + $0x308] sm:$0xff]
  %v2841 = vld [vmem:[%s5 + $0x310] sm:$0xff]
  %v2842 = vld [vmem:[%s5 + $0x318] sm:$0xff]
  %v2843 = vld [vmem:[%s5 + $0x320] sm:$0xff]
  %v2844 = vld [vmem:[%s5 + $0x328] sm:$0xff]
  %v2845 = vld [vmem:[%s5 + $0x330] sm:$0xff]
  %v2846 = vld [vmem:[%s5 + $0x338] sm:$0xff]
  %v2847 = vld [vmem:[%s5 + $0x340] sm:$0xff]
  %v2848 = vld [vmem:[%s5 + $0x348] sm:$0xff]
  %v2849 = vld [vmem:[%s5 + $0x350] sm:$0xff]
  %v2850 = vld [vmem:[%s5 + $0x358] sm:$0xff]
  %v2851 = vld [vmem:[%s5 + $0x360] sm:$0xff]
  %v2852 = vld [vmem:[%s5 + $0x368] sm:$0xff]
  %v2853 = vld [vmem:[%s5 + $0x370] sm:$0xff]
  %v2854 = vld [vmem:[%s5 + $0x378] sm:$0xff]
  %v2855 = vld [vmem:[%s5 + $0x380] sm:$0xff]
  %v2856 = vld [vmem:[%s5 + $0x388] sm:$0xff]
  %v2857 = vld [vmem:[%s5 + $0x390] sm:$0xff]
  %v2858 = vld [vmem:[%s5 + $0x398] sm:$0xff]
  %v2859 = vld [vmem:[%s5 + $0x3a0] sm:$0xff]
  %v2860 = vld [vmem:[%s5 + $0x3a8] sm:$0xff]
  %v2861 = vld [vmem:[%s5 + $0x3b0] sm:$0xff]
  %v2862 = vld [vmem:[%s5 + $0x3b8] sm:$0xff]
  %v2863 = vld [vmem:[%s5 + $0x3c0] sm:$0xff]
  %v2864 = vld [vmem:[%s5 + $0x3c8] sm:$0xff]
  %v2865 = vld [vmem:[%s5 + $0x3d0] sm:$0xff]
  %v2866 = vld [vmem:[%s5 + $0x3d8] sm:$0xff]
  %v2867 = vld [vmem:[%s5 + $0x3e0] sm:$0xff]
  %v2868 = vld [vmem:[%s5 + $0x3e8] sm:$0xff]
  %v2869 = vld [vmem:[%s5 + $0x3f0] sm:$0xff]
  %v2870 = vld [vmem:[%s5 + $0x3f8] sm:$0xff]
  %v2871 = vld [vmem:[%s6] sm:$0xf]
  %v2873 = vlaneseq
  %v2874 = vshrl.u32 %v2873, 7
  %v2875 = vsub.s32 0, %v2874
  %v2876 = vrot.slane %v2871, %v2875
  %v2877 = vlaneseq
  %v2878 = vshrl.u32 %v2877, 7
  %v2879 = vsub.s32 1, %v2878
  %v2880 = vrot.slane %v2871, %v2879
  %v2881 = vlaneseq
  %v2882 = vshrl.u32 %v2881, 7
  %v2883 = vsub.s32 2, %v2882
  %v2884 = vrot.slane %v2871, %v2883
  %v2885 = vlaneseq
  %v2886 = vshrl.u32 %v2885, 7
  %v2887 = vsub.s32 3, %v2886
  %v2888 = vrot.slane %v2871, %v2887
  %v3021 = vunpack.c.l.b16 %v2743
  %v3022 = vunpack.c.h.b16 %v2743
  %v3023 = vunpack.c.l.b16 %v2744
  %v3024 = vunpack.c.h.b16 %v2744
  %v3025 = vunpack.c.l.b16 %v2745
  %v3026 = vunpack.c.h.b16 %v2745
  %v3027 = vunpack.c.l.b16 %v2746
  %v3028 = vunpack.c.h.b16 %v2746
  %v3029 = vunpack.c.l.b16 %v2747
  %v3030 = vunpack.c.h.b16 %v2747
  %v3031 = vunpack.c.l.b16 %v2748
  %v3032 = vunpack.c.h.b16 %v2748
  %v3033 = vunpack.c.l.b16 %v2749
  %v3034 = vunpack.c.h.b16 %v2749
  %v3035 = vunpack.c.l.b16 %v2750
  %v3036 = vunpack.c.h.b16 %v2750
  %v3037 = vunpack.c.l.b16 %v2751
  %v3038 = vunpack.c.h.b16 %v2751
  %v3039 = vunpack.c.l.b16 %v2752
  %v3040 = vunpack.c.h.b16 %v2752
  %v3041 = vunpack.c.l.b16 %v2753
  %v3042 = vunpack.c.h.b16 %v2753
  %v3043 = vunpack.c.l.b16 %v2754
  %v3044 = vunpack.c.h.b16 %v2754
  %v3045 = vunpack.c.l.b16 %v2755
  %v3046 = vunpack.c.h.b16 %v2755
  %v3047 = vunpack.c.l.b16 %v2756
  %v3048 = vunpack.c.h.b16 %v2756
  %v3049 = vunpack.c.l.b16 %v2757
  %v3050 = vunpack.c.h.b16 %v2757
  %v3051 = vunpack.c.l.b16 %v2758
  %v3052 = vunpack.c.h.b16 %v2758
  %v3053 = vunpack.c.l.b16 %v2759
  %v3054 = vunpack.c.h.b16 %v2759
  %v3055 = vunpack.c.l.b16 %v2760
  %v3056 = vunpack.c.h.b16 %v2760
  %v3057 = vunpack.c.l.b16 %v2761
  %v3058 = vunpack.c.h.b16 %v2761
  %v3059 = vunpack.c.l.b16 %v2762
  %v3060 = vunpack.c.h.b16 %v2762
  %v3061 = vunpack.c.l.b16 %v2763
  %v3062 = vunpack.c.h.b16 %v2763
  %v3063 = vunpack.c.l.b16 %v2764
  %v3064 = vunpack.c.h.b16 %v2764
  %v3065 = vunpack.c.l.b16 %v2765
  %v3066 = vunpack.c.h.b16 %v2765
  %v3067 = vunpack.c.l.b16 %v2766
  %v3068 = vunpack.c.h.b16 %v2766
  %v3069 = vunpack.c.l.b16 %v2767
  %v3070 = vunpack.c.h.b16 %v2767
  %v3071 = vunpack.c.l.b16 %v2768
  %v3072 = vunpack.c.h.b16 %v2768
  %v3073 = vunpack.c.l.b16 %v2769
  %v3074 = vunpack.c.h.b16 %v2769
  %v3075 = vunpack.c.l.b16 %v2770
  %v3076 = vunpack.c.h.b16 %v2770
  %v3077 = vunpack.c.l.b16 %v2771
  %v3078 = vunpack.c.h.b16 %v2771
  %v3079 = vunpack.c.l.b16 %v2772
  %v3080 = vunpack.c.h.b16 %v2772
  %v3081 = vunpack.c.l.b16 %v2773
  %v3082 = vunpack.c.h.b16 %v2773
  %v3083 = vunpack.c.l.b16 %v2774
  %v3084 = vunpack.c.h.b16 %v2774
  %v3085 = vunpack.c.l.b16 %v2775
  %v3086 = vunpack.c.h.b16 %v2775
  %v3087 = vunpack.c.l.b16 %v2776
  %v3088 = vunpack.c.h.b16 %v2776
  %v3089 = vunpack.c.l.b16 %v2777
  %v3090 = vunpack.c.h.b16 %v2777
  %v3091 = vunpack.c.l.b16 %v2778
  %v3092 = vunpack.c.h.b16 %v2778
  %v3093 = vunpack.c.l.b16 %v2779
  %v3094 = vunpack.c.h.b16 %v2779
  %v3095 = vunpack.c.l.b16 %v2780
  %v3096 = vunpack.c.h.b16 %v2780
  %v3097 = vunpack.c.l.b16 %v2781
  %v3098 = vunpack.c.h.b16 %v2781
  %v3099 = vunpack.c.l.b16 %v2782
  %v3100 = vunpack.c.h.b16 %v2782
  %v3101 = vunpack.c.l.b16 %v2783
  %v3102 = vunpack.c.h.b16 %v2783
  %v3103 = vunpack.c.l.b16 %v2784
  %v3104 = vunpack.c.h.b16 %v2784
  %v3105 = vunpack.c.l.b16 %v2785
  %v3106 = vunpack.c.h.b16 %v2785
  %v3107 = vunpack.c.l.b16 %v2786
  %v3108 = vunpack.c.h.b16 %v2786
  %v3109 = vunpack.c.l.b16 %v2787
  %v3110 = vunpack.c.h.b16 %v2787
  %v3111 = vunpack.c.l.b16 %v2788
  %v3112 = vunpack.c.h.b16 %v2788
  %v3113 = vunpack.c.l.b16 %v2789
  %v3114 = vunpack.c.h.b16 %v2789
  %v3115 = vunpack.c.l.b16 %v2790
  %v3116 = vunpack.c.h.b16 %v2790
  %v3117 = vunpack.c.l.b16 %v2791
  %v3118 = vunpack.c.h.b16 %v2791
  %v3119 = vunpack.c.l.b16 %v2792
  %v3120 = vunpack.c.h.b16 %v2792
  %v3121 = vunpack.c.l.b16 %v2793
  %v3122 = vunpack.c.h.b16 %v2793
  %v3123 = vunpack.c.l.b16 %v2794
  %v3124 = vunpack.c.h.b16 %v2794
  %v3125 = vunpack.c.l.b16 %v2795
  %v3126 = vunpack.c.h.b16 %v2795
  %v3127 = vunpack.c.l.b16 %v2796
  %v3128 = vunpack.c.h.b16 %v2796
  %v3129 = vunpack.c.l.b16 %v2797
  %v3130 = vunpack.c.h.b16 %v2797
  %v3131 = vunpack.c.l.b16 %v2798
  %v3132 = vunpack.c.h.b16 %v2798
  %v3133 = vunpack.c.l.b16 %v2799
  %v3134 = vunpack.c.h.b16 %v2799
  %v3135 = vunpack.c.l.b16 %v2800
  %v3136 = vunpack.c.h.b16 %v2800
  %v3137 = vunpack.c.l.b16 %v2801
  %v3138 = vunpack.c.h.b16 %v2801
  %v3139 = vunpack.c.l.b16 %v2802
  %v3140 = vunpack.c.h.b16 %v2802
  %v3141 = vunpack.c.l.b16 %v2803
  %v3142 = vunpack.c.h.b16 %v2803
  %v3143 = vunpack.c.l.b16 %v2804
  %v3144 = vunpack.c.h.b16 %v2804
  %v3145 = vunpack.c.l.b16 %v2805
  %v3146 = vunpack.c.h.b16 %v2805
  %v3147 = vunpack.c.l.b16 %v2806
  %v3148 = vunpack.c.h.b16 %v2806
  %v3149 = vunpack.c.l.b16 %v2807
  %v3150 = vunpack.c.h.b16 %v2807
  %v3151 = vunpack.c.l.b16 %v2808
  %v3152 = vunpack.c.h.b16 %v2808
  %v3153 = vunpack.c.l.b16 %v2809
  %v3154 = vunpack.c.h.b16 %v2809
  %v3155 = vunpack.c.l.b16 %v2810
  %v3156 = vunpack.c.h.b16 %v2810
  %v3157 = vunpack.c.l.b16 %v2811
  %v3158 = vunpack.c.h.b16 %v2811
  %v3159 = vunpack.c.l.b16 %v2812
  %v3160 = vunpack.c.h.b16 %v2812
  %v3161 = vunpack.c.l.b16 %v2813
  %v3162 = vunpack.c.h.b16 %v2813
  %v3163 = vunpack.c.l.b16 %v2814
  %v3164 = vunpack.c.h.b16 %v2814
  %v3165 = vunpack.c.l.b16 %v2815
  %v3166 = vunpack.c.h.b16 %v2815
  %v3167 = vunpack.c.l.b16 %v2816
  %v3168 = vunpack.c.h.b16 %v2816
  %v3169 = vunpack.c.l.b16 %v2817
  %v3170 = vunpack.c.h.b16 %v2817
  %v3171 = vunpack.c.l.b16 %v2818
  %v3172 = vunpack.c.h.b16 %v2818
  %v3173 = vunpack.c.l.b16 %v2819
  %v3174 = vunpack.c.h.b16 %v2819
  %v3175 = vunpack.c.l.b16 %v2820
  %v3176 = vunpack.c.h.b16 %v2820
  %v3177 = vunpack.c.l.b16 %v2821
  %v3178 = vunpack.c.h.b16 %v2821
  %v3179 = vunpack.c.l.b16 %v2822
  %v3180 = vunpack.c.h.b16 %v2822
  %v3181 = vunpack.c.l.b16 %v2823
  %v3182 = vunpack.c.h.b16 %v2823
  %v3183 = vunpack.c.l.b16 %v2824
  %v3184 = vunpack.c.h.b16 %v2824
  %v3185 = vunpack.c.l.b16 %v2825
  %v3186 = vunpack.c.h.b16 %v2825
  %v3187 = vunpack.c.l.b16 %v2826
  %v3188 = vunpack.c.h.b16 %v2826
  %v3189 = vunpack.c.l.b16 %v2827
  %v3190 = vunpack.c.h.b16 %v2827
  %v3191 = vunpack.c.l.b16 %v2828
  %v3192 = vunpack.c.h.b16 %v2828
  %v3193 = vunpack.c.l.b16 %v2829
  %v3194 = vunpack.c.h.b16 %v2829
  %v3195 = vunpack.c.l.b16 %v2830
  %v3196 = vunpack.c.h.b16 %v2830
  %v3197 = vunpack.c.l.b16 %v2831
  %v3198 = vunpack.c.h.b16 %v2831
  %v3199 = vunpack.c.l.b16 %v2832
  %v3200 = vunpack.c.h.b16 %v2832
  %v3201 = vunpack.c.l.b16 %v2833
  %v3202 = vunpack.c.h.b16 %v2833
  %v3203 = vunpack.c.l.b16 %v2834
  %v3204 = vunpack.c.h.b16 %v2834
  %v3205 = vunpack.c.l.b16 %v2835
  %v3206 = vunpack.c.h.b16 %v2835
  %v3207 = vunpack.c.l.b16 %v2836
  %v3208 = vunpack.c.h.b16 %v2836
  %v3209 = vunpack.c.l.b16 %v2837
  %v3210 = vunpack.c.h.b16 %v2837
  %v3211 = vunpack.c.l.b16 %v2838
  %v3212 = vunpack.c.h.b16 %v2838
  %v3213 = vunpack.c.l.b16 %v2839
  %v3214 = vunpack.c.h.b16 %v2839
  %v3215 = vunpack.c.l.b16 %v2840
  %v3216 = vunpack.c.h.b16 %v2840
  %v3217 = vunpack.c.l.b16 %v2841
  %v3218 = vunpack.c.h.b16 %v2841
  %v3219 = vunpack.c.l.b16 %v2842
  %v3220 = vunpack.c.h.b16 %v2842
  %v3221 = vunpack.c.l.b16 %v2843
  %v3222 = vunpack.c.h.b16 %v2843
  %v3223 = vunpack.c.l.b16 %v2844
  %v3224 = vunpack.c.h.b16 %v2844
  %v3225 = vunpack.c.l.b16 %v2845
  %v3226 = vunpack.c.h.b16 %v2845
  %v3227 = vunpack.c.l.b16 %v2846
  %v3228 = vunpack.c.h.b16 %v2846
  %v3229 = vunpack.c.l.b16 %v2847
  %v3230 = vunpack.c.h.b16 %v2847
  %v3231 = vunpack.c.l.b16 %v2848
  %v3232 = vunpack.c.h.b16 %v2848
  %v3233 = vunpack.c.l.b16 %v2849
  %v3234 = vunpack.c.h.b16 %v2849
  %v3235 = vunpack.c.l.b16 %v2850
  %v3236 = vunpack.c.h.b16 %v2850
  %v3237 = vunpack.c.l.b16 %v2851
  %v3238 = vunpack.c.h.b16 %v2851
  %v3239 = vunpack.c.l.b16 %v2852
  %v3240 = vunpack.c.h.b16 %v2852
  %v3241 = vunpack.c.l.b16 %v2853
  %v3242 = vunpack.c.h.b16 %v2853
  %v3243 = vunpack.c.l.b16 %v2854
  %v3244 = vunpack.c.h.b16 %v2854
  %v3245 = vunpack.c.l.b16 %v2855
  %v3246 = vunpack.c.h.b16 %v2855
  %v3247 = vunpack.c.l.b16 %v2856
  %v3248 = vunpack.c.h.b16 %v2856
  %v3249 = vunpack.c.l.b16 %v2857
  %v3250 = vunpack.c.h.b16 %v2857
  %v3251 = vunpack.c.l.b16 %v2858
  %v3252 = vunpack.c.h.b16 %v2858
  %v3253 = vunpack.c.l.b16 %v2859
  %v3254 = vunpack.c.h.b16 %v2859
  %v3255 = vunpack.c.l.b16 %v2860
  %v3256 = vunpack.c.h.b16 %v2860
  %v3257 = vunpack.c.l.b16 %v2861
  %v3258 = vunpack.c.h.b16 %v2861
  %v3259 = vunpack.c.l.b16 %v2862
  %v3260 = vunpack.c.h.b16 %v2862
  %v3261 = vunpack.c.l.b16 %v2863
  %v3262 = vunpack.c.h.b16 %v2863
  %v3263 = vunpack.c.l.b16 %v2864
  %v3264 = vunpack.c.h.b16 %v2864
  %v3265 = vunpack.c.l.b16 %v2865
  %v3266 = vunpack.c.h.b16 %v2865
  %v3267 = vunpack.c.l.b16 %v2866
  %v3268 = vunpack.c.h.b16 %v2866
  %v3269 = vunpack.c.l.b16 %v2867
  %v3270 = vunpack.c.h.b16 %v2867
  %v3271 = vunpack.c.l.b16 %v2868
  %v3272 = vunpack.c.h.b16 %v2868
  %v3273 = vunpack.c.l.b16 %v2869
  %v3274 = vunpack.c.h.b16 %v2869
  %v3275 = vunpack.c.l.b16 %v2870
  %v3276 = vunpack.c.h.b16 %v2870
  %v3277 = vpack.c.b16 %v3025, %v3021
  %v3278 = vpack.c.b16 %v3026, %v3022
  %v3279 = vpack.c.b16 %v3027, %v3023
  %v3280 = vpack.c.b16 %v3028, %v3024
  %v3281 = vpack.c.b16 %v3033, %v3029
  %v3282 = vpack.c.b16 %v3034, %v3030
  %v3283 = vpack.c.b16 %v3035, %v3031
  %v3284 = vpack.c.b16 %v3036, %v3032
  %v3285 = vpack.c.b16 %v3041, %v3037
  %v3286 = vpack.c.b16 %v3042, %v3038
  %v3287 = vpack.c.b16 %v3043, %v3039
  %v3288 = vpack.c.b16 %v3044, %v3040
  %v3289 = vpack.c.b16 %v3049, %v3045
  %v3290 = vpack.c.b16 %v3050, %v3046
  %v3291 = vpack.c.b16 %v3051, %v3047
  %v3292 = vpack.c.b16 %v3052, %v3048
  %v3293 = vpack.c.b16 %v3057, %v3053
  %v3294 = vpack.c.b16 %v3058, %v3054
  %v3295 = vpack.c.b16 %v3059, %v3055
  %v3296 = vpack.c.b16 %v3060, %v3056
  %v3297 = vpack.c.b16 %v3065, %v3061
  %v3298 = vpack.c.b16 %v3066, %v3062
  %v3299 = vpack.c.b16 %v3067, %v3063
  %v3300 = vpack.c.b16 %v3068, %v3064
  %v3301 = vpack.c.b16 %v3073, %v3069
  %v3302 = vpack.c.b16 %v3074, %v3070
  %v3303 = vpack.c.b16 %v3075, %v3071
  %v3304 = vpack.c.b16 %v3076, %v3072
  %v3305 = vpack.c.b16 %v3081, %v3077
  %v3306 = vpack.c.b16 %v3082, %v3078
  %v3307 = vpack.c.b16 %v3083, %v3079
  %v3308 = vpack.c.b16 %v3084, %v3080
  %v3309 = vpack.c.b16 %v3089, %v3085
  %v3310 = vpack.c.b16 %v3090, %v3086
  %v3311 = vpack.c.b16 %v3091, %v3087
  %v3312 = vpack.c.b16 %v3092, %v3088
  %v3313 = vpack.c.b16 %v3097, %v3093
  %v3314 = vpack.c.b16 %v3098, %v3094
  %v3315 = vpack.c.b16 %v3099, %v3095
  %v3316 = vpack.c.b16 %v3100, %v3096
  %v3317 = vpack.c.b16 %v3105, %v3101
  %v3318 = vpack.c.b16 %v3106, %v3102
  %v3319 = vpack.c.b16 %v3107, %v3103
  %v3320 = vpack.c.b16 %v3108, %v3104
  %v3321 = vpack.c.b16 %v3113, %v3109
  %v3322 = vpack.c.b16 %v3114, %v3110
  %v3323 = vpack.c.b16 %v3115, %v3111
  %v3324 = vpack.c.b16 %v3116, %v3112
  %v3325 = vpack.c.b16 %v3121, %v3117
  %v3326 = vpack.c.b16 %v3122, %v3118
  %v3327 = vpack.c.b16 %v3123, %v3119
  %v3328 = vpack.c.b16 %v3124, %v3120
  %v3329 = vpack.c.b16 %v3129, %v3125
  %v3330 = vpack.c.b16 %v3130, %v3126
  %v3331 = vpack.c.b16 %v3131, %v3127
  %v3332 = vpack.c.b16 %v3132, %v3128
  %v3333 = vpack.c.b16 %v3137, %v3133
  %v3334 = vpack.c.b16 %v3138, %v3134
  %v3335 = vpack.c.b16 %v3139, %v3135
  %v3336 = vpack.c.b16 %v3140, %v3136
  %v3337 = vpack.c.b16 %v3145, %v3141
  %v3338 = vpack.c.b16 %v3146, %v3142
  %v3339 = vpack.c.b16 %v3147, %v3143
  %v3340 = vpack.c.b16 %v3148, %v3144
  %v3341 = vpack.c.b16 %v3153, %v3149
  %v3342 = vpack.c.b16 %v3154, %v3150
  %v3343 = vpack.c.b16 %v3155, %v3151
  %v3344 = vpack.c.b16 %v3156, %v3152
  %v3345 = vpack.c.b16 %v3161, %v3157
  %v3346 = vpack.c.b16 %v3162, %v3158
  %v3347 = vpack.c.b16 %v3163, %v3159
  %v3348 = vpack.c.b16 %v3164, %v3160
  %v3349 = vpack.c.b16 %v3169, %v3165
  %v3350 = vpack.c.b16 %v3170, %v3166
  %v3351 = vpack.c.b16 %v3171, %v3167
  %v3352 = vpack.c.b16 %v3172, %v3168
  %v3353 = vpack.c.b16 %v3177, %v3173
  %v3354 = vpack.c.b16 %v3178, %v3174
  %v3355 = vpack.c.b16 %v3179, %v3175
  %v3356 = vpack.c.b16 %v3180, %v3176
  %v3357 = vpack.c.b16 %v3185, %v3181
  %v3358 = vpack.c.b16 %v3186, %v3182
  %v3359 = vpack.c.b16 %v3187, %v3183
  %v3360 = vpack.c.b16 %v3188, %v3184
  %v3361 = vpack.c.b16 %v3193, %v3189
  %v3362 = vpack.c.b16 %v3194, %v3190
  %v3363 = vpack.c.b16 %v3195, %v3191
  %v3364 = vpack.c.b16 %v3196, %v3192
  %v3365 = vpack.c.b16 %v3201, %v3197
  %v3366 = vpack.c.b16 %v3202, %v3198
  %v3367 = vpack.c.b16 %v3203, %v3199
  %v3368 = vpack.c.b16 %v3204, %v3200
  %v3369 = vpack.c.b16 %v3209, %v3205
  %v3370 = vpack.c.b16 %v3210, %v3206
  %v3371 = vpack.c.b16 %v3211, %v3207
  %v3372 = vpack.c.b16 %v3212, %v3208
  %v3373 = vpack.c.b16 %v3217, %v3213
  %v3374 = vpack.c.b16 %v3218, %v3214
  %v3375 = vpack.c.b16 %v3219, %v3215
  %v3376 = vpack.c.b16 %v3220, %v3216
  %v3377 = vpack.c.b16 %v3225, %v3221
  %v3378 = vpack.c.b16 %v3226, %v3222
  %v3379 = vpack.c.b16 %v3227, %v3223
  %v3380 = vpack.c.b16 %v3228, %v3224
  %v3381 = vpack.c.b16 %v3233, %v3229
  %v3382 = vpack.c.b16 %v3234, %v3230
  %v3383 = vpack.c.b16 %v3235, %v3231
  %v3384 = vpack.c.b16 %v3236, %v3232
  %v3385 = vpack.c.b16 %v3241, %v3237
  %v3386 = vpack.c.b16 %v3242, %v3238
  %v3387 = vpack.c.b16 %v3243, %v3239
  %v3388 = vpack.c.b16 %v3244, %v3240
  %v3389 = vpack.c.b16 %v3249, %v3245
  %v3390 = vpack.c.b16 %v3250, %v3246
  %v3391 = vpack.c.b16 %v3251, %v3247
  %v3392 = vpack.c.b16 %v3252, %v3248
  %v3393 = vpack.c.b16 %v3257, %v3253
  %v3394 = vpack.c.b16 %v3258, %v3254
  %v3395 = vpack.c.b16 %v3259, %v3255
  %v3396 = vpack.c.b16 %v3260, %v3256
  %v3397 = vpack.c.b16 %v3265, %v3261
  %v3398 = vpack.c.b16 %v3266, %v3262
  %v3399 = vpack.c.b16 %v3267, %v3263
  %v3400 = vpack.c.b16 %v3268, %v3264
  %v3401 = vpack.c.b16 %v3273, %v3269
  %v3402 = vpack.c.b16 %v3274, %v3270
  %v3403 = vpack.c.b16 %v3275, %v3271
  %v3404 = vpack.c.b16 %v3276, %v3272
  %3533 = vmatprep.subr.bf16.mxu0 %v3306
  %3534 = vmatpush1.bf16.msra.mxu0 %v3305
  %3535 = vmatprep.subr.bf16.mxu0 %v3302
  %3536 = vmatpush1.bf16.msra.mxu0 %v3301
  %3537 = vmatprep.subr.bf16.mxu0 %v3298
  %3538 = vmatpush1.bf16.msra.mxu0 %v3297
  %3539 = vmatprep.subr.bf16.mxu0 %v3294
  %3540 = vmatpush1.bf16.msra.mxu0 %v3293
  %3541 = vmatprep.subr.bf16.mxu0 %v3290
  %3542 = vmatpush1.bf16.msra.mxu0 %v3289
  %3543 = vmatprep.subr.bf16.mxu0 %v3286
  %3544 = vmatpush1.bf16.msra.mxu0 %v3285
  %3545 = vmatprep.subr.bf16.mxu0 %v3282
  %3546 = vmatpush1.bf16.msra.mxu0 %v3281
  %3547 = vmatprep.subr.bf16.mxu0 %v3278
  %3548 = vmatpush1.bf16.msra.mxu0 %v3277
  %3549 = vmatprep.subr.bf16.mxu0 %v3338
  %3550 = vmatpush2.bf16.msra.mxu0 %v3337
  %3551 = vmatprep.subr.bf16.mxu0 %v3334
  %3552 = vmatpush2.bf16.msra.mxu0 %v3333
  %3553 = vmatprep.subr.bf16.mxu0 %v3330
  %3554 = vmatpush2.bf16.msra.mxu0 %v3329
  %3555 = vmatprep.subr.bf16.mxu0 %v3326
  %3556 = vmatpush2.bf16.msra.mxu0 %v3325
  %3557 = vmatprep.subr.bf16.mxu0 %v3322
  %3558 = vmatpush2.bf16.msra.mxu0 %v3321
  %3559 = vmatprep.subr.bf16.mxu0 %v3318
  %3560 = vmatpush2.bf16.msra.mxu0 %v3317
  %3561 = vmatprep.subr.bf16.mxu0 %v3314
  %3562 = vmatpush2.bf16.msra.mxu0 %v3313
  %3563 = vmatprep.subr.bf16.mxu0 %v3310
  %3564 = vmatpush2.bf16.msra.mxu0 %v3309
  %3565 = vmatprep.mubr.bf16.mxu0 %v2740
  %3566 = vmatmul.mubr.bf16.gmra.mxu0 %v2739
  %v3567 = vpop.f32.mrf.mxu0
  %v3568 = vadd.f32 %v2876, %v3567
  %v3569 = vpop.f32.mrf.mxu0
  %v3570 = vadd.f32 %v2880, %v3569
  %v3571 = vpop.f32.mrf.mxu0
  %v3572 = vpop.f32.mrf.mxu0
  %3573 = vdwg.mxu0
  %3574 = vmatprep.subr.bf16.mxu0 %v3370
  %3575 = vmatpush1.bf16.msra.mxu0 %v3369
  %3576 = vmatprep.subr.bf16.mxu0 %v3366
  %3577 = vmatpush1.bf16.msra.mxu0 %v3365
  %3578 = vmatprep.subr.bf16.mxu0 %v3362
  %3579 = vmatpush1.bf16.msra.mxu0 %v3361
  %3580 = vmatprep.subr.bf16.mxu0 %v3358
  %3581 = vmatpush1.bf16.msra.mxu0 %v3357
  %3582 = vmatprep.subr.bf16.mxu0 %v3354
  %3583 = vmatpush1.bf16.msra.mxu0 %v3353
  %3584 = vmatprep.subr.bf16.mxu0 %v3350
  %3585 = vmatpush1.bf16.msra.mxu0 %v3349
  %3586 = vmatprep.subr.bf16.mxu0 %v3346
  %3587 = vmatpush1.bf16.msra.mxu0 %v3345
  %3588 = vmatprep.subr.bf16.mxu0 %v3342
  %3589 = vmatpush1.bf16.msra.mxu0 %v3341
  %3590 = vmatprep.subr.bf16.mxu0 %v3402
  %3591 = vmatpush2.bf16.msra.mxu0 %v3401
  %3592 = vmatprep.subr.bf16.mxu0 %v3398
  %3593 = vmatpush2.bf16.msra.mxu0 %v3397
  %3594 = vmatprep.subr.bf16.mxu0 %v3394
  %3595 = vmatpush2.bf16.msra.mxu0 %v3393
  %3596 = vmatprep.subr.bf16.mxu0 %v3390
  %3597 = vmatpush2.bf16.msra.mxu0 %v3389
  %3598 = vmatprep.subr.bf16.mxu0 %v3386
  %3599 = vmatpush2.bf16.msra.mxu0 %v3385
  %3600 = vmatprep.subr.bf16.mxu0 %v3382
  %3601 = vmatpush2.bf16.msra.mxu0 %v3381
  %3602 = vmatprep.subr.bf16.mxu0 %v3378
  %3603 = vmatpush2.bf16.msra.mxu0 %v3377
  %3604 = vmatprep.subr.bf16.mxu0 %v3374
  %3605 = vmatpush2.bf16.msra.mxu0 %v3373
  %3606 = vmatprep.mubr.bf16.mxu0 %v2742
  %3607 = vmatmul.mubr.bf16.gmra.mxu0 %v2741
  %v3608 = vpop.f32.mrf.mxu0
  %v3609 = vadd.f32 %v3568, %v3608
  %v3610 = vpop.f32.mrf.mxu0
  %v3611 = vadd.f32 %v3570, %v3610
  %v3612 = vpop.f32.mrf.mxu0
  %v3613 = vpop.f32.mrf.mxu0
  %3614 = vdwg.mxu0
  %3615 = vmatprep.subr.bf16.mxu0 %v3308
  %3616 = vmatpush1.bf16.msra.mxu0 %v3307
  %3617 = vmatprep.subr.bf16.mxu0 %v3304
  %3618 = vmatpush1.bf16.msra.mxu0 %v3303
  %3619 = vmatprep.subr.bf16.mxu0 %v3300
  %3620 = vmatpush1.bf16.msra.mxu0 %v3299
  %3621 = vmatprep.subr.bf16.mxu0 %v3296
  %3622 = vmatpush1.bf16.msra.mxu0 %v3295
  %3623 = vmatprep.subr.bf16.mxu0 %v3292
  %3624 = vmatpush1.bf16.msra.mxu0 %v3291
  %3625 = vmatprep.subr.bf16.mxu0 %v3288
  %3626 = vmatpush1.bf16.msra.mxu0 %v3287
  %3627 = vmatprep.subr.bf16.mxu0 %v3284
  %3628 = vmatpush1.bf16.msra.mxu0 %v3283
  %3629 = vmatprep.subr.bf16.mxu0 %v3280
  %3630 = vmatpush1.bf16.msra.mxu0 %v3279
  %3631 = vmatprep.subr.bf16.mxu0 %v3340
  %3632 = vmatpush2.bf16.msra.mxu0 %v3339
  %3633 = vmatprep.subr.bf16.mxu0 %v3336
  %3634 = vmatpush2.bf16.msra.mxu0 %v3335
  %3635 = vmatprep.subr.bf16.mxu0 %v3332
  %3636 = vmatpush2.bf16.msra.mxu0 %v3331
  %3637 = vmatprep.subr.bf16.mxu0 %v3328
  %3638 = vmatpush2.bf16.msra.mxu0 %v3327
  %3639 = vmatprep.subr.bf16.mxu0 %v3324
  %3640 = vmatpush2.bf16.msra.mxu0 %v3323
  %3641 = vmatprep.subr.bf16.mxu0 %v3320
  %3642 = vmatpush2.bf16.msra.mxu0 %v3319
  %3643 = vmatprep.subr.bf16.mxu0 %v3316
  %3644 = vmatpush2.bf16.msra.mxu0 %v3315
  %3645 = vmatprep.subr.bf16.mxu0 %v3312
  %3646 = vmatpush2.bf16.msra.mxu0 %v3311
  %3647 = vmatprep.mubr.bf16.mxu0 %v2740
  %3648 = vmatmul.mubr.bf16.gmra.mxu0 %v2739
  %v3649 = vpop.f32.mrf.mxu0
  %v3650 = vadd.f32 %v2884, %v3649
  %v3651 = vpop.f32.mrf.mxu0
  %v3652 = vadd.f32 %v2888, %v3651
  %v3653 = vpop.f32.mrf.mxu0
  %v3654 = vpop.f32.mrf.mxu0
  %3655 = vdwg.mxu0
  %3656 = vmatprep.subr.bf16.mxu0 %v3372
  %3657 = vmatpush1.bf16.msra.mxu0 %v3371
  %3658 = vmatprep.subr.bf16.mxu0 %v3368
  %3659 = vmatpush1.bf16.msra.mxu0 %v3367
  %3660 = vmatprep.subr.bf16.mxu0 %v3364
  %3661 = vmatpush1.bf16.msra.mxu0 %v3363
  %3662 = vmatprep.subr.bf16.mxu0 %v3360
  %3663 = vmatpush1.bf16.msra.mxu0 %v3359
  %3664 = vmatprep.subr.bf16.mxu0 %v3356
  %3665 = vmatpush1.bf16.msra.mxu0 %v3355
  %3666 = vmatprep.subr.bf16.mxu0 %v3352
  %3667 = vmatpush1.bf16.msra.mxu0 %v3351
  %3668 = vmatprep.subr.bf16.mxu0 %v3348
  %3669 = vmatpush1.bf16.msra.mxu0 %v3347
  %3670 = vmatprep.subr.bf16.mxu0 %v3344
  %3671 = vmatpush1.bf16.msra.mxu0 %v3343
  %3672 = vmatprep.subr.bf16.mxu0 %v3404
  %3673 = vmatpush2.bf16.msra.mxu0 %v3403
  %3674 = vmatprep.subr.bf16.mxu0 %v3400
  %3675 = vmatpush2.bf16.msra.mxu0 %v3399
  %3676 = vmatprep.subr.bf16.mxu0 %v3396
  %3677 = vmatpush2.bf16.msra.mxu0 %v3395
  %3678 = vmatprep.subr.bf16.mxu0 %v3392
  %3679 = vmatpush2.bf16.msra.mxu0 %v3391
  %3680 = vmatprep.subr.bf16.mxu0 %v3388
  %3681 = vmatpush2.bf16.msra.mxu0 %v3387
  %3682 = vmatprep.subr.bf16.mxu0 %v3384
  %3683 = vmatpush2.bf16.msra.mxu0 %v3383
  %3684 = vmatprep.subr.bf16.mxu0 %v3380
  %3685 = vmatpush2.bf16.msra.mxu0 %v3379
  %3686 = vmatprep.subr.bf16.mxu0 %v3376
  %3687 = vmatpush2.bf16.msra.mxu0 %v3375
  %3688 = vmatprep.mubr.bf16.mxu0 %v2742
  %3689 = vmatmul.mubr.bf16.gmra.mxu0 %v2741
  %v3690 = vpop.f32.mrf.mxu0
  %v3691 = vadd.f32 %v3650, %v3690
  %v3692 = vpop.f32.mrf.mxu0
  %v3693 = vadd.f32 %v3652, %v3692
  %v3694 = vpop.f32.mrf.mxu0
  %v3695 = vpop.f32.mrf.mxu0
  %3696 = vdwg.mxu0
  %vm3697 = vcmp.ge.f32.partialorder %v3609, 0.0
  %vm3698 = vcmp.ge.f32.partialorder %v3611, 0.0
  %vm3699 = vcmp.ge.f32.partialorder %v3691, 0.0
  %vm3700 = vcmp.ge.f32.partialorder %v3693, 0.0
  %v3701 = vmul.f32 %v3609, 0.2
  %v3702 = vmul.f32 %v3611, 0.2
  %v3703 = vmul.f32 %v3691, 0.2
  %v3704 = vmul.f32 %v3693, 0.2
  %v3705 = vsel %vm3697, %v3609, %v3701
  %v3706 = vsel %vm3698, %v3611, %v3702
  %v3707 = vsel %vm3699, %v3691, %v3703
  %v3708 = vsel %vm3700, %v3693, %v3704
  %v3709 = vld [vmem:[%s7] sm:$0xf]
  %v3710 = vunpack.c.l.bf16 %v3709
  %v3712 = vlaneseq
  %v3713 = vshrl.u32 %v3712, 7
  %v3714 = vsub.s32 0, %v3713
  %v3715 = vrot.slane %v3710, %v3714
  %v3716 = vlaneseq
  %v3717 = vshrl.u32 %v3716, 7
  %v3718 = vsub.s32 2, %v3717
  %v3719 = vrot.slane %v3710, %v3718
  %v3720 = vlaneseq
  %v3721 = vshrl.u32 %v3720, 7
  %v3722 = vsub.s32 4, %v3721
  %v3723 = vrot.slane %v3710, %v3722
  %v3724 = vlaneseq
  %v3725 = vshrl.u32 %v3724, 7
  %v3726 = vsub.s32 6, %v3725
  %v3727 = vrot.slane %v3710, %v3726
  %v3732 = vlaneseq
  %v3733 = vshrl.u32 %v3732, 7
  %v3734 = vsub.s32 0, %v3733
  %v3735 = vrot.slane %v3715, %v3734
  %v3736 = vlaneseq
  %v3737 = vshrl.u32 %v3736, 7
  %v3738 = vsub.s32 0, %v3737
  %v3739 = vrot.slane %v3719, %v3738
  %v3740 = vlaneseq
  %v3741 = vshrl.u32 %v3740, 7
  %v3742 = vsub.s32 0, %v3741
  %v3743 = vrot.slane %v3723, %v3742
  %v3744 = vlaneseq
  %v3745 = vshrl.u32 %v3744, 7
  %v3746 = vsub.s32 0, %v3745
  %v3747 = vrot.slane %v3727, %v3746
  %v3748 = vmul.f32 %v3705, %v3735
  %v3749 = vmul.f32 %v3706, %v3739
  %v3750 = vmul.f32 %v3707, %v3743
  %v3751 = vmul.f32 %v3708, %v3747
  %v3752 = vadd.f32 %v3748, %v3749
  %v3753 = vadd.f32 %v3752, %v3750
  %v3754 = vadd.f32 %v3753, %v3751
  %3755 = vadd.xlane.f32.xlu0 %v3754
  %v3756 = vpop.xlane.xlu0 %3755
  %s3757 = sld [smem:[#allocation2]]
  %v3758 = vstv %s3757
  %v3759 = vadd.f32 %v3756, %v3758
  %v3760 = vxor.u32 %v3759, 2147483648
  %v3761 = vmul.f32 %v3760, 1.442695
  %v3762 = vpow.pop %v3761
  %v3763 = vadd.f32 %v3762, 1.0
  %v3764 = vrcp.pop %v3763
  %v3765 = vmul.f32 1.0, %v3764
  %vm3766 = vcmask 7168
  %3767 = vst.msk [vmem:[%s9] sm:$0xff] %vm3766, %v3765
  // Predicated region
  $region38: #{discriminator_forward.1} parent=0 // pred_check
    _
  $region39: #{discriminator_forward.1} parent=0 // pred_check_branch
    %3769 = sbr.rel (0) target = $region41
  $region40: #{discriminator_forward.1} parent=0 // pred_region
    _
  $region41: #{discriminator_forward.1} parent=0 // pred_fallthru
    _
  // Predicated region
  $region42: #{discriminator_forward.1} parent=0 // pred_check
    _
  $region43: #{discriminator_forward.1} parent=0 // pred_check_branch
    %3771 = sbr.rel (0) target = $region45
  $region44: #{discriminator_forward.1} parent=0 // pred_region
    _
  $region45: #{discriminator_forward.1} parent=0 // pred_fallthru
    _

</llo_original>
